<compile_context>
chip_gen: v7x
topology: tpu7x:2x2x1
jax: 0.10.0
libtpu: 0.0.40
codegen_flags: <defaults>
</compile_context>

<pallas_src>
import jax
import jax.numpy as jnp
from jax import lax
from jax.experimental import pallas as pl
from jax.experimental.pallas import tpu as pltpu

# ---- model dims (consistent with the PyTorch module's hard-coded 768 / 7x7) ----
B = 2
IMG_C, IMG_H, IMG_W = 3, 56, 56          # small NCHW image
PATCH = 8                                 # 56/8 = 7  -> 7x7 = 49 tokens
L = (IMG_H // PATCH) * (IMG_W // PATCH)   # 49
C_PATCH = IMG_C * PATCH * PATCH           # 192
C = 768                                   # swin_num_features
NUM_CLASSES = 7
K_PAD = 128                               # class dim padded to a full lane width
EPS = 1e-5


def _swin_fer_kernel(xp_ref, wpe_ref, bpe_ref, wht_ref, hmb_ref, bh_ref,
                     pool_ref, out_ref, hm_ref):
    """Single grid step: the whole (small) batch at once.

    xp_ref   : (B*L, C_PATCH)   unfolded image patches, all batch elements
    wpe_ref  : (C_PATCH, C)     patch-embed weight (stand-in encoder)
    bpe_ref  : (1, C)           patch-embed bias
    wht_ref  : (C, K_PAD)       gamma-folded head weight^T, zero-padded classes
    hmb_ref  : (1, K_PAD)       beta @ W_head^T (CAM bias from LN shift), padded
    bh_ref   : (1, K_PAD)       head bias, padded
    pool_ref : (B, B*L)         per-batch token-mean pooling matrix (rows sum to 1)
    out_ref  : (B, K_PAD)       padded logits
    hm_ref   : (B*L, K_PAD)     padded per-token class scores (CAM, pre-reshape)
    """
    xp = xp_ref[...]                                                # (BL, Cp)

    # ---- stand-in encoder: patch embedding (MXU matmul) ----
    emb = jnp.dot(xp, wpe_ref[...],
                  preferred_element_type=jnp.float32) + bpe_ref[...]  # (BL, C)

    # ---- LayerNorm statistics over channels, one reduction pass ----
    mu = jnp.mean(emb, axis=-1, keepdims=True)
    ex2 = jnp.mean(emb * emb, axis=-1, keepdims=True)
    var = ex2 - mu * mu                       # biased variance (LayerNorm)
    xn = (emb - mu) * lax.rsqrt(var + EPS)    # affine folded into wht/hmb

    # ---- CAM: hm = LayerNorm(emb) @ W_head^T   (gamma/beta pre-folded) ----
    hm = jnp.dot(xn, wht_ref[...],
                 preferred_element_type=jnp.float32) + hmb_ref[...]   # (BL, Kp)
    hm_ref[...] = hm

    # ---- AdaptiveAvgPool1d(1) over tokens + Linear head, via pooling matmul ----
    # logits = mean_over_tokens(hm) + b_head  (mean commutes with the head)
    out_ref[...] = jnp.dot(pool_ref[...], hm,
                           preferred_element_type=jnp.float32) + bh_ref[...]


@jax.jit
def swin_trans_fer_forward(img, w_pe, b_pe, gamma, beta, w_head, b_head):
    """img: (B, 3, 56, 56) NCHW float32. Returns (logits (B, K), hm (B, K, 7, 7))."""
    Bn = img.shape[0]
    gh, gw = IMG_H // PATCH, IMG_W // PATCH
    BL = Bn * L

    # unfold NCHW image into flattened patches (glue, not the hot path)
    xp = img.reshape(Bn, IMG_C, gh, PATCH, gw, PATCH)
    xp = xp.transpose(0, 2, 4, 1, 3, 5).reshape(BL, C_PATCH)

    w_pe2 = w_pe.reshape(C_PATCH, C)
    b_pe2 = b_pe.reshape(1, C)

    # Fold LayerNorm affine into the head weight / CAM bias; pad classes to 128.
    w_head_t = w_head.T                                        # (C, K)
    wht_eff = gamma[:, None] * w_head_t                        # (C, K)
    wht_eff = jnp.pad(wht_eff, ((0, 0), (0, K_PAD - NUM_CLASSES)))
    hm_bias = (beta @ w_head_t).reshape(1, NUM_CLASSES)
    hm_bias = jnp.pad(hm_bias, ((0, 0), (0, K_PAD - NUM_CLASSES)))
    bh_pad = jnp.pad(b_head.reshape(1, NUM_CLASSES),
                     ((0, 0), (0, K_PAD - NUM_CLASSES)))

    # Per-batch token-mean pooling matrix (B, B*L); each row sums to 1.
    seg = jnp.arange(BL, dtype=jnp.int32) // L
    pool = (seg[None, :] == jnp.arange(Bn, dtype=jnp.int32)[:, None])
    pool = pool.astype(jnp.float32) / float(L)

    bytes_accessed = 4 * (xp.size + w_pe2.size + b_pe2.size + wht_eff.size
                          + hm_bias.size + bh_pad.size + pool.size
                          + Bn * K_PAD + BL * K_PAD)
    cost = pl.CostEstimate(
        flops=2 * BL * C_PATCH * C + 2 * BL * C * K_PAD + 2 * Bn * BL * K_PAD,
        transcendentals=BL,                      # rsqrt per token
        bytes_accessed=bytes_accessed)

    out_pad, hm_pad = pl.pallas_call(
        _swin_fer_kernel,
        out_shape=(
            jax.ShapeDtypeStruct((Bn, K_PAD), jnp.float32),
            jax.ShapeDtypeStruct((BL, K_PAD), jnp.float32),
        ),
        grid=(1,),
        in_specs=[
            pl.BlockSpec((BL, C_PATCH), lambda i: (0, 0)),
            pl.BlockSpec((C_PATCH, C), lambda i: (0, 0)),
            pl.BlockSpec((1, C), lambda i: (0, 0)),
            pl.BlockSpec((C, K_PAD), lambda i: (0, 0)),
            pl.BlockSpec((1, K_PAD), lambda i: (0, 0)),
            pl.BlockSpec((1, K_PAD), lambda i: (0, 0)),
            pl.BlockSpec((Bn, BL), lambda i: (0, 0)),
        ],
        out_specs=(
            pl.BlockSpec((Bn, K_PAD), lambda i: (0, 0)),
            pl.BlockSpec((BL, K_PAD), lambda i: (0, 0)),
        ),
        compiler_params=pltpu.CompilerParams(
            dimension_semantics=("arbitrary",)),
        cost_estimate=cost,
    )(xp, w_pe2, b_pe2, wht_eff, hm_bias, bh_pad, pool)

    # strip class padding outside the kernel (plain-JAX glue)
    logits = out_pad[:, :NUM_CLASSES]
    hm = hm_pad[:, :NUM_CLASSES].reshape(Bn, L, NUM_CLASSES)
    # (B, L, K) -> (B, K, L) -> (B, K, 7, 7)  (matches feat * fc_weights sum over C)
    hm = jnp.transpose(hm, (0, 2, 1)).reshape(Bn, NUM_CLASSES, gh, gw)
    return logits, hm


def _reference_forward(img, w_pe, b_pe, gamma, beta, w_head, b_head):
    """Pure-JAX reference of the unfused math, for a correctness check."""
    Bn = img.shape[0]
    gh, gw = IMG_H // PATCH, IMG_W // PATCH
    xp = img.reshape(Bn, IMG_C, gh, PATCH, gw, PATCH)
    xp = xp.transpose(0, 2, 4, 1, 3, 5).reshape(Bn, L, C_PATCH)
    emb = xp @ w_pe.reshape(C_PATCH, C) + b_pe
    mu = emb.mean(-1, keepdims=True)
    var = ((emb - mu) ** 2).mean(-1, keepdims=True)
    xn = (emb - mu) / jnp.sqrt(var + EPS) * gamma + beta
    feat = xn.mean(axis=1)
    logits = feat @ w_head.T + b_head
    hm = jnp.einsum("blc,kc->bkl", xn, w_head).reshape(Bn, NUM_CLASSES, gh, gw)
    return logits, hm


if __name__ == "__main__":
    key = jax.random.PRNGKey(0)
    k_img, k_wpe, k_bpe, k_g, k_b, k_wh, k_bh = jax.random.split(key, 7)

    img = jax.random.normal(k_img, (B, IMG_C, IMG_H, IMG_W), jnp.float32)

    # deterministic parameter init
    w_pe = jax.random.normal(k_wpe, (C_PATCH, C), jnp.float32) * 0.02
    b_pe = jax.random.normal(k_bpe, (C,), jnp.float32) * 0.02
    gamma = jnp.ones((C,), jnp.float32) + 0.1 * jax.random.normal(k_g, (C,), jnp.float32)
    beta = 0.1 * jax.random.normal(k_b, (C,), jnp.float32)
    w_head = jax.random.normal(k_wh, (NUM_CLASSES, C), jnp.float32) * 0.02
    b_head = jax.random.normal(k_bh, (NUM_CLASSES,), jnp.float32) * 0.02

    logits, hm = swin_trans_fer_forward(img, w_pe, b_pe, gamma, beta, w_head, b_head)
    jax.block_until_ready((logits, hm))

    ref_logits, ref_hm = _reference_forward(img, w_pe, b_pe, gamma, beta, w_head, b_head)
    assert logits.shape == (B, NUM_CLASSES)
    assert hm.shape == (B, NUM_CLASSES, 7, 7)
    assert jnp.allclose(logits, ref_logits, atol=1e-3, rtol=1e-3)
    assert jnp.allclose(hm, ref_hm, atol=1e-3, rtol=1e-3)

    print("KERNEL_OK")
</pallas_src>

<mosaic_0001>
module attributes {stable_mosaic.version = 11 : i64} {
  func.func @_swin_fer_kernel(%arg0: i32, %arg1: memref<98x192xf32, #tpu.memory_space<vmem>>, %arg2: memref<192x768xf32, #tpu.memory_space<vmem>>, %arg3: memref<1x768xf32, #tpu.memory_space<vmem>>, %arg4: memref<768x128xf32, #tpu.memory_space<vmem>>, %arg5: memref<1x128xf32, #tpu.memory_space<vmem>>, %arg6: memref<1x128xf32, #tpu.memory_space<vmem>>, %arg7: memref<2x98xf32, #tpu.memory_space<vmem>>, %arg8: memref<2x128xf32, #tpu.memory_space<vmem>>, %arg9: memref<98x128xf32, #tpu.memory_space<vmem>>) attributes {dimension_semantics = [#tpu.dimension_semantics<arbitrary>], iteration_bounds = array<i64: 1>, scalar_prefetch = 0 : i64, scratch_operands = 0 : i64, tpu.core_type = #tpu.core_type<tc>, window_params = [{pipeline_mode = #tpu.pipeline_mode<synchronous>, transform_indices = @transform_0, window_bounds = array<i64: 98, 192>}, {pipeline_mode = #tpu.pipeline_mode<synchronous>, transform_indices = @transform_1, window_bounds = array<i64: 192, 768>}, {pipeline_mode = #tpu.pipeline_mode<synchronous>, transform_indices = @transform_2, window_bounds = array<i64: 1, 768>}, {pipeline_mode = #tpu.pipeline_mode<synchronous>, transform_indices = @transform_3, window_bounds = array<i64: 768, 128>}, {pipeline_mode = #tpu.pipeline_mode<synchronous>, transform_indices = @transform_4, window_bounds = array<i64: 1, 128>}, {pipeline_mode = #tpu.pipeline_mode<synchronous>, transform_indices = @transform_5, window_bounds = array<i64: 1, 128>}, {pipeline_mode = #tpu.pipeline_mode<synchronous>, transform_indices = @transform_6, window_bounds = array<i64: 2, 98>}, {pipeline_mode = #tpu.pipeline_mode<synchronous>, transform_indices = @transform_7, window_bounds = array<i64: 2, 128>}, {pipeline_mode = #tpu.pipeline_mode<synchronous>, transform_indices = @transform_8, window_bounds = array<i64: 98, 128>}]} {
    %c0 = arith.constant 0 : index
    %c0_0 = arith.constant 0 : index
    %0 = vector.load %arg1[%c0, %c0_0] : memref<98x192xf32, #tpu.memory_space<vmem>>, vector<98x192xf32>
    %c0_1 = arith.constant 0 : index
    %c0_2 = arith.constant 0 : index
    %1 = vector.load %arg2[%c0_1, %c0_2] : memref<192x768xf32, #tpu.memory_space<vmem>>, vector<192x768xf32>
    %cst = arith.constant dense<0.000000e+00> : vector<98x768xf32>
    %2 = tpu.matmul %0, %1, %cst {dimension_numbers = #tpu.dot_dimension_numbers<[1], [0], [0], [1], [0, 0, 1, 1], [], []>} : vector<98x192xf32>, vector<192x768xf32>, vector<98x768xf32> -> vector<98x768xf32>
    %c0_3 = arith.constant 0 : index
    %c0_4 = arith.constant 0 : index
    %3 = vector.load %arg3[%c0_3, %c0_4] : memref<1x768xf32, #tpu.memory_space<vmem>>, vector<1x768xf32>
    %4 = vector.broadcast %3 : vector<1x768xf32> to vector<98x768xf32>
    %5 = arith.addf %2, %4 : vector<98x768xf32>
    %cst_5 = arith.constant dense<0.000000e+00> : vector<98xf32>
    %6 = vector.multi_reduction <add>, %5, %cst_5 [1] : vector<98x768xf32> to vector<98xf32>
    %7 = vector.shape_cast %6 : vector<98xf32> to vector<98x1xf32>
    %cst_6 = arith.constant 7.680000e+02 : f32
    %8 = vector.broadcast %cst_6 : f32 to vector<98x1xf32>
    %9 = arith.divf %7, %8 : vector<98x1xf32>
    %10 = arith.mulf %5, %5 : vector<98x768xf32>
    %cst_7 = arith.constant dense<0.000000e+00> : vector<98xf32>
    %11 = vector.multi_reduction <add>, %10, %cst_7 [1] : vector<98x768xf32> to vector<98xf32>
    %12 = vector.shape_cast %11 : vector<98xf32> to vector<98x1xf32>
    %cst_8 = arith.constant 7.680000e+02 : f32
    %13 = vector.broadcast %cst_8 : f32 to vector<98x1xf32>
    %14 = arith.divf %12, %13 : vector<98x1xf32>
    %15 = arith.mulf %9, %9 : vector<98x1xf32>
    %16 = arith.subf %14, %15 : vector<98x1xf32>
    %17 = vector.broadcast %9 : vector<98x1xf32> to vector<98x768xf32>
    %18 = arith.subf %5, %17 : vector<98x768xf32>
    %cst_9 = arith.constant 9.99999974E-6 : f32
    %19 = vector.broadcast %cst_9 : f32 to vector<98x1xf32>
    %20 = arith.addf %16, %19 : vector<98x1xf32>
    %21 = math.rsqrt %20 : vector<98x1xf32>
    %22 = vector.broadcast %21 : vector<98x1xf32> to vector<98x768xf32>
    %23 = arith.mulf %18, %22 : vector<98x768xf32>
    %c0_10 = arith.constant 0 : index
    %c0_11 = arith.constant 0 : index
    %24 = vector.load %arg4[%c0_10, %c0_11] : memref<768x128xf32, #tpu.memory_space<vmem>>, vector<768x128xf32>
    %cst_12 = arith.constant dense<0.000000e+00> : vector<98x128xf32>
    %25 = tpu.matmul %23, %24, %cst_12 {dimension_numbers = #tpu.dot_dimension_numbers<[1], [0], [0], [1], [0, 0, 1, 1], [], []>} : vector<98x768xf32>, vector<768x128xf32>, vector<98x128xf32> -> vector<98x128xf32>
    %c0_13 = arith.constant 0 : index
    %c0_14 = arith.constant 0 : index
    %26 = vector.load %arg5[%c0_13, %c0_14] : memref<1x128xf32, #tpu.memory_space<vmem>>, vector<1x128xf32>
    %27 = vector.broadcast %26 : vector<1x128xf32> to vector<98x128xf32>
    %28 = arith.addf %25, %27 : vector<98x128xf32>
    %c0_15 = arith.constant 0 : index
    %c0_16 = arith.constant 0 : index
    %29 = vector.load %arg9[%c0_15, %c0_16] : memref<98x128xf32, #tpu.memory_space<vmem>>, vector<98x128xf32>
    tpu.vector_store %arg9[%c0_15, %c0_16], %28 {strides = array<i32>} : memref<98x128xf32, #tpu.memory_space<vmem>>, vector<98x128xf32>,
    %c0_17 = arith.constant 0 : index
    %c0_18 = arith.constant 0 : index
    %30 = vector.load %arg7[%c0_17, %c0_18] : memref<2x98xf32, #tpu.memory_space<vmem>>, vector<2x98xf32>
    %cst_19 = arith.constant dense<0.000000e+00> : vector<2x128xf32>
    %31 = tpu.matmul %30, %28, %cst_19 {dimension_numbers = #tpu.dot_dimension_numbers<[1], [0], [0], [1], [0, 0, 1, 1], [], []>} : vector<2x98xf32>, vector<98x128xf32>, vector<2x128xf32> -> vector<2x128xf32>
    %c0_20 = arith.constant 0 : index
    %c0_21 = arith.constant 0 : index
    %32 = vector.load %arg6[%c0_20, %c0_21] : memref<1x128xf32, #tpu.memory_space<vmem>>, vector<1x128xf32>
    %33 = vector.broadcast %32 : vector<1x128xf32> to vector<2x128xf32>
    %34 = arith.addf %31, %33 : vector<2x128xf32>
    %c0_22 = arith.constant 0 : index
    %c0_23 = arith.constant 0 : index
    %35 = vector.load %arg8[%c0_22, %c0_23] : memref<2x128xf32, #tpu.memory_space<vmem>>, vector<2x128xf32>
    tpu.vector_store %arg8[%c0_22, %c0_23], %34 {strides = array<i32>} : memref<2x128xf32, #tpu.memory_space<vmem>>, vector<2x128xf32>,
    return
  }
  func.func @transform_0(%arg0: i32) -> (i32, i32) {
    %c0_i32 = arith.constant 0 : i32
    %c0_i32_0 = arith.constant 0 : i32
    %c0_i32_1 = arith.constant 0 : i32
    return %c0_i32, %c0_i32_0 : i32, i32
  }
  func.func @transform_1(%arg0: i32) -> (i32, i32) {
    %c0_i32 = arith.constant 0 : i32
    %c0_i32_0 = arith.constant 0 : i32
    %c0_i32_1 = arith.constant 0 : i32
    return %c0_i32, %c0_i32_0 : i32, i32
  }
  func.func @transform_2(%arg0: i32) -> (i32, i32) {
    %c0_i32 = arith.constant 0 : i32
    %c0_i32_0 = arith.constant 0 : i32
    %c0_i32_1 = arith.constant 0 : i32
    return %c0_i32, %c0_i32_0 : i32, i32
  }
  func.func @transform_3(%arg0: i32) -> (i32, i32) {
    %c0_i32 = arith.constant 0 : i32
    %c0_i32_0 = arith.constant 0 : i32
    %c0_i32_1 = arith.constant 0 : i32
    return %c0_i32, %c0_i32_0 : i32, i32
  }
  func.func @transform_4(%arg0: i32) -> (i32, i32) {
    %c0_i32 = arith.constant 0 : i32
    %c0_i32_0 = arith.constant 0 : i32
    %c0_i32_1 = arith.constant 0 : i32
    return %c0_i32, %c0_i32_0 : i32, i32
  }
  func.func @transform_5(%arg0: i32) -> (i32, i32) {
    %c0_i32 = arith.constant 0 : i32
    %c0_i32_0 = arith.constant 0 : i32
    %c0_i32_1 = arith.constant 0 : i32
    return %c0_i32, %c0_i32_0 : i32, i32
  }
  func.func @transform_6(%arg0: i32) -> (i32, i32) {
    %c0_i32 = arith.constant 0 : i32
    %c0_i32_0 = arith.constant 0 : i32
    %c0_i32_1 = arith.constant 0 : i32
    return %c0_i32, %c0_i32_0 : i32, i32
  }
  func.func @transform_7(%arg0: i32) -> (i32, i32) {
    %c0_i32 = arith.constant 0 : i32
    %c0_i32_0 = arith.constant 0 : i32
    %c0_i32_1 = arith.constant 0 : i32
    return %c0_i32, %c0_i32_0 : i32, i32
  }
  func.func @transform_8(%arg0: i32) -> (i32, i32) {
    %c0_i32 = arith.constant 0 : i32
    %c0_i32_0 = arith.constant 0 : i32
    %c0_i32_1 = arith.constant 0 : i32
    return %c0_i32, %c0_i32_0 : i32, i32
  }
}

</mosaic_0001>

<llo_original>
// kernel: swin_trans_fer_forward.1
$region0: #{swin_trans_fer_forward.1}
  #allocation0 [shape = 'u32[]', space=smem, size = 0x4, offset = 0x4, fixed_abs, tag = 'smem constant byte address 0x4 - core index']
  #allocation1 [shape = 'u32[144,128]{1,0:T(1,128)}', space=vmem, size = 0x12000, scoped, tag = 'internal scratch']
  %s0 = inlined_call_operand.vmem [shape: f32[98,192], index: 0, kind: input, shape index: {}]
  %s1 = inlined_call_operand.vmem [shape: f32[192,768], index: 1, kind: input, shape index: {}]
  %s2 = inlined_call_operand.vmem [shape: f32[1,768], index: 2, kind: input, shape index: {}]
  %s3 = inlined_call_operand.vmem [shape: f32[768,128], index: 3, kind: input, shape index: {}]
  %s4 = inlined_call_operand.vmem [shape: f32[1,128], index: 4, kind: input, shape index: {}]
  %s5 = inlined_call_operand.vmem [shape: f32[1,128], index: 5, kind: input, shape index: {}]
  %s6 = inlined_call_operand.vmem [shape: f32[2,98], index: 6, kind: input, shape index: {}]
  %s7 = inlined_call_operand.hbm [shape: f32[2,128], index: 7, kind: output, shape index: {0}]
  %s8 = inlined_call_operand.vmem [shape: f32[98,128], index: 8, kind: output, shape index: {1}]
  %9 = xla_tuple %s7, %s8
  %s10 = sld [smem:[#allocation0]]
  $region46: #{swin_trans_fer_forward.1} parent=0
    _
  %s12 = ssub.s32 1, %s10
  %s13 = scalar_select 0, %s12, %s10
  $region1: #{swin_trans_fer_forward.1} parent=0
    #allocation2 [shape = 'u8[1024]{0}', space=vmem, size = 0x400, scoped, tag = 'output window, operand 0, single buffered']
    #allocation3 [shape = 's32[1]{0}', space=sflag, size = 0x4, scoped, tag = 'scoped memory for swin_trans_fer_forward.1']
    %14 = vsyncpa [#allocation3], 0
    // Predicated region
    $region2: #{swin_trans_fer_forward.1} parent=1 // pred_check
      _
    $region3: #{swin_trans_fer_forward.1} parent=1 // pred_check_branch
      %16 = sbr.rel (0) target = $region5
    $region4: #{swin_trans_fer_forward.1} parent=1 // pred_region
      _
    $region5: #{swin_trans_fer_forward.1} parent=1 // pred_fallthru
      _
    // Predicated region
    $region6: #{swin_trans_fer_forward.1} parent=1 // pred_check
      _
    $region7: #{swin_trans_fer_forward.1} parent=1 // pred_check_branch
      %18 = sbr.rel (0) target = $region9
    $region8: #{swin_trans_fer_forward.1} parent=1 // pred_region
      _
    $region9: #{swin_trans_fer_forward.1} parent=1 // pred_fallthru
      _
    // Predicated region
    $region10: #{swin_trans_fer_forward.1} parent=1 // pred_check
      _
    $region11: #{swin_trans_fer_forward.1} parent=1 // pred_check_branch
      %20 = sbr.rel (0) target = $region13
    $region12: #{swin_trans_fer_forward.1} parent=1 // pred_region
      _
    $region13: #{swin_trans_fer_forward.1} parent=1 // pred_fallthru
      _
    // Predicated region
    $region14: #{swin_trans_fer_forward.1} parent=1 // pred_check
      _
    $region15: #{swin_trans_fer_forward.1} parent=1 // pred_check_branch
      %22 = sbr.rel (0) target = $region17
    $region16: #{swin_trans_fer_forward.1} parent=1 // pred_region
      _
    $region17: #{swin_trans_fer_forward.1} parent=1 // pred_fallthru
      _
    // Predicated region
    $region18: #{swin_trans_fer_forward.1} parent=1 // pred_check
      _
    $region19: #{swin_trans_fer_forward.1} parent=1 // pred_check_branch
      %24 = sbr.rel (0) target = $region21
    $region20: #{swin_trans_fer_forward.1} parent=1 // pred_region
      _
    $region21: #{swin_trans_fer_forward.1} parent=1 // pred_fallthru
      _
    // Predicated region
    $region22: #{swin_trans_fer_forward.1} parent=1 // pred_check
      _
    $region23: #{swin_trans_fer_forward.1} parent=1 // pred_check_branch
      %26 = sbr.rel (0) target = $region25
    $region24: #{swin_trans_fer_forward.1} parent=1 // pred_region
      _
    $region25: #{swin_trans_fer_forward.1} parent=1 // pred_fallthru
      _
    // Predicated region
    $region26: #{swin_trans_fer_forward.1} parent=1 // pred_check
      _
    $region27: #{swin_trans_fer_forward.1} parent=1 // pred_check_branch
      %28 = sbr.rel (0) target = $region29
    $region28: #{swin_trans_fer_forward.1} parent=1 // pred_region
      _
    $region29: #{swin_trans_fer_forward.1} parent=1 // pred_fallthru
      _
    %v29 = vld [vmem:[%s0] sm:$0xff]
    %v30 = vld [vmem:[%s0 + $0x8] sm:$0xff]
    %v31 = vld [vmem:[%s0 + $0x10] sm:$0xff]
    %v32 = vld [vmem:[%s0 + $0x18] sm:$0xff]
    %v33 = vld [vmem:[%s0 + $0x20] sm:$0xff]
    %v34 = vld [vmem:[%s0 + $0x28] sm:$0xff]
    %v35 = vld [vmem:[%s0 + $0x30] sm:$0xff]
    %v36 = vld [vmem:[%s0 + $0x38] sm:$0xff]
    %v37 = vld [vmem:[%s0 + $0x40] sm:$0xff]
    %v38 = vld [vmem:[%s0 + $0x48] sm:$0xff]
    %v39 = vld [vmem:[%s0 + $0x50] sm:$0xff]
    %v40 = vld [vmem:[%s0 + $0x58] sm:$0xff]
    %v41 = vld [vmem:[%s0 + $0x60] sm:$0xff]
    %v42 = vld [vmem:[%s0 + $0x68] sm:$0xff]
    %v43 = vld [vmem:[%s0 + $0x70] sm:$0xff]
    %v44 = vld [vmem:[%s0 + $0x78] sm:$0xff]
    %v45 = vld [vmem:[%s0 + $0x80] sm:$0xff]
    %v46 = vld [vmem:[%s0 + $0x88] sm:$0xff]
    %v47 = vld [vmem:[%s0 + $0x90] sm:$0xff]
    %v48 = vld [vmem:[%s0 + $0x98] sm:$0xff]
    %v49 = vld [vmem:[%s0 + $0xa0] sm:$0xff]
    %v50 = vld [vmem:[%s0 + $0xa8] sm:$0xff]
    %v51 = vld [vmem:[%s0 + $0xb0] sm:$0xff]
    %v52 = vld [vmem:[%s0 + $0xb8] sm:$0xff]
    %v53 = vld [vmem:[%s0 + $0xc0] sm:$0x3]
    %v54 = vld [vmem:[%s0 + $0xc8] sm:$0x3]
    %v55 = vld [vmem:[%s1] sm:$0xff]
    %v56 = vld [vmem:[%s1 + $0x8] sm:$0xff]
    %v57 = vld [vmem:[%s1 + $0x10] sm:$0xff]
    %v58 = vld [vmem:[%s1 + $0x18] sm:$0xff]
    %v59 = vld [vmem:[%s1 + $0x20] sm:$0xff]
    %v60 = vld [vmem:[%s1 + $0x28] sm:$0xff]
    %v61 = vld [vmem:[%s1 + $0x30] sm:$0xff]
    %v62 = vld [vmem:[%s1 + $0x38] sm:$0xff]
    %v63 = vld [vmem:[%s1 + $0x40] sm:$0xff]
    %v64 = vld [vmem:[%s1 + $0x48] sm:$0xff]
    %v65 = vld [vmem:[%s1 + $0x50] sm:$0xff]
    %v66 = vld [vmem:[%s1 + $0x58] sm:$0xff]
    %v67 = vld [vmem:[%s1 + $0x60] sm:$0xff]
    %v68 = vld [vmem:[%s1 + $0x68] sm:$0xff]
    %v69 = vld [vmem:[%s1 + $0x70] sm:$0xff]
    %v70 = vld [vmem:[%s1 + $0x78] sm:$0xff]
    %v71 = vld [vmem:[%s1 + $0x80] sm:$0xff]
    %v72 = vld [vmem:[%s1 + $0x88] sm:$0xff]
    %v73 = vld [vmem:[%s1 + $0x90] sm:$0xff]
    %v74 = vld [vmem:[%s1 + $0x98] sm:$0xff]
    %v75 = vld [vmem:[%s1 + $0xa0] sm:$0xff]
    %v76 = vld [vmem:[%s1 + $0xa8] sm:$0xff]
    %v77 = vld [vmem:[%s1 + $0xb0] sm:$0xff]
    %v78 = vld [vmem:[%s1 + $0xb8] sm:$0xff]
    %v79 = vld [vmem:[%s1 + $0xc0] sm:$0xff]
    %v80 = vld [vmem:[%s1 + $0xc8] sm:$0xff]
    %v81 = vld [vmem:[%s1 + $0xd0] sm:$0xff]
    %v82 = vld [vmem:[%s1 + $0xd8] sm:$0xff]
    %v83 = vld [vmem:[%s1 + $0xe0] sm:$0xff]
    %v84 = vld [vmem:[%s1 + $0xe8] sm:$0xff]
    %v85 = vld [vmem:[%s1 + $0xf0] sm:$0xff]
    %v86 = vld [vmem:[%s1 + $0xf8] sm:$0xff]
    %v87 = vld [vmem:[%s1 + $0x100] sm:$0xff]
    %v88 = vld [vmem:[%s1 + $0x108] sm:$0xff]
    %v89 = vld [vmem:[%s1 + $0x110] sm:$0xff]
    %v90 = vld [vmem:[%s1 + $0x118] sm:$0xff]
    %v91 = vld [vmem:[%s1 + $0x120] sm:$0xff]
    %v92 = vld [vmem:[%s1 + $0x128] sm:$0xff]
    %v93 = vld [vmem:[%s1 + $0x130] sm:$0xff]
    %v94 = vld [vmem:[%s1 + $0x138] sm:$0xff]
    %v95 = vld [vmem:[%s1 + $0x140] sm:$0xff]
    %v96 = vld [vmem:[%s1 + $0x148] sm:$0xff]
    %v97 = vld [vmem:[%s1 + $0x150] sm:$0xff]
    %v98 = vld [vmem:[%s1 + $0x158] sm:$0xff]
    %v99 = vld [vmem:[%s1 + $0x160] sm:$0xff]
    %v100 = vld [vmem:[%s1 + $0x168] sm:$0xff]
    %v101 = vld [vmem:[%s1 + $0x170] sm:$0xff]
    %v102 = vld [vmem:[%s1 + $0x178] sm:$0xff]
    %v103 = vld [vmem:[%s1 + $0x180] sm:$0xff]
    %v104 = vld [vmem:[%s1 + $0x188] sm:$0xff]
    %v105 = vld [vmem:[%s1 + $0x190] sm:$0xff]
    %v106 = vld [vmem:[%s1 + $0x198] sm:$0xff]
    %v107 = vld [vmem:[%s1 + $0x1a0] sm:$0xff]
    %v108 = vld [vmem:[%s1 + $0x1a8] sm:$0xff]
    %v109 = vld [vmem:[%s1 + $0x1b0] sm:$0xff]
    %v110 = vld [vmem:[%s1 + $0x1b8] sm:$0xff]
    %v111 = vld [vmem:[%s1 + $0x1c0] sm:$0xff]
    %v112 = vld [vmem:[%s1 + $0x1c8] sm:$0xff]
    %v113 = vld [vmem:[%s1 + $0x1d0] sm:$0xff]
    %v114 = vld [vmem:[%s1 + $0x1d8] sm:$0xff]
    %v115 = vld [vmem:[%s1 + $0x1e0] sm:$0xff]
    %v116 = vld [vmem:[%s1 + $0x1e8] sm:$0xff]
    %v117 = vld [vmem:[%s1 + $0x1f0] sm:$0xff]
    %v118 = vld [vmem:[%s1 + $0x1f8] sm:$0xff]
    %v119 = vld [vmem:[%s1 + $0x200] sm:$0xff]
    %v120 = vld [vmem:[%s1 + $0x208] sm:$0xff]
    %v121 = vld [vmem:[%s1 + $0x210] sm:$0xff]
    %v122 = vld [vmem:[%s1 + $0x218] sm:$0xff]
    %v123 = vld [vmem:[%s1 + $0x220] sm:$0xff]
    %v124 = vld [vmem:[%s1 + $0x228] sm:$0xff]
    %v125 = vld [vmem:[%s1 + $0x230] sm:$0xff]
    %v126 = vld [vmem:[%s1 + $0x238] sm:$0xff]
    %v127 = vld [vmem:[%s1 + $0x240] sm:$0xff]
    %v128 = vld [vmem:[%s1 + $0x248] sm:$0xff]
    %v129 = vld [vmem:[%s1 + $0x250] sm:$0xff]
    %v130 = vld [vmem:[%s1 + $0x258] sm:$0xff]
    %v131 = vld [vmem:[%s1 + $0x260] sm:$0xff]
    %v132 = vld [vmem:[%s1 + $0x268] sm:$0xff]
    %v133 = vld [vmem:[%s1 + $0x270] sm:$0xff]
    %v134 = vld [vmem:[%s1 + $0x278] sm:$0xff]
    %v135 = vld [vmem:[%s1 + $0x280] sm:$0xff]
    %v136 = vld [vmem:[%s1 + $0x288] sm:$0xff]
    %v137 = vld [vmem:[%s1 + $0x290] sm:$0xff]
    %v138 = vld [vmem:[%s1 + $0x298] sm:$0xff]
    %v139 = vld [vmem:[%s1 + $0x2a0] sm:$0xff]
    %v140 = vld [vmem:[%s1 + $0x2a8] sm:$0xff]
    %v141 = vld [vmem:[%s1 + $0x2b0] sm:$0xff]
    %v142 = vld [vmem:[%s1 + $0x2b8] sm:$0xff]
    %v143 = vld [vmem:[%s1 + $0x2c0] sm:$0xff]
    %v144 = vld [vmem:[%s1 + $0x2c8] sm:$0xff]
    %v145 = vld [vmem:[%s1 + $0x2d0] sm:$0xff]
    %v146 = vld [vmem:[%s1 + $0x2d8] sm:$0xff]
    %v147 = vld [vmem:[%s1 + $0x2e0] sm:$0xff]
    %v148 = vld [vmem:[%s1 + $0x2e8] sm:$0xff]
    %v149 = vld [vmem:[%s1 + $0x2f0] sm:$0xff]
    %v150 = vld [vmem:[%s1 + $0x2f8] sm:$0xff]
    %v151 = vld [vmem:[%s1 + $0x300] sm:$0xff]
    %v152 = vld [vmem:[%s1 + $0x308] sm:$0xff]
    %v153 = vld [vmem:[%s1 + $0x310] sm:$0xff]
    %v154 = vld [vmem:[%s1 + $0x318] sm:$0xff]
    %v155 = vld [vmem:[%s1 + $0x320] sm:$0xff]
    %v156 = vld [vmem:[%s1 + $0x328] sm:$0xff]
    %v157 = vld [vmem:[%s1 + $0x330] sm:$0xff]
    %v158 = vld [vmem:[%s1 + $0x338] sm:$0xff]
    %v159 = vld [vmem:[%s1 + $0x340] sm:$0xff]
    %v160 = vld [vmem:[%s1 + $0x348] sm:$0xff]
    %v161 = vld [vmem:[%s1 + $0x350] sm:$0xff]
    %v162 = vld [vmem:[%s1 + $0x358] sm:$0xff]
    %v163 = vld [vmem:[%s1 + $0x360] sm:$0xff]
    %v164 = vld [vmem:[%s1 + $0x368] sm:$0xff]
    %v165 = vld [vmem:[%s1 + $0x370] sm:$0xff]
    %v166 = vld [vmem:[%s1 + $0x378] sm:$0xff]
    %v167 = vld [vmem:[%s1 + $0x380] sm:$0xff]
    %v168 = vld [vmem:[%s1 + $0x388] sm:$0xff]
    %v169 = vld [vmem:[%s1 + $0x390] sm:$0xff]
    %v170 = vld [vmem:[%s1 + $0x398] sm:$0xff]
    %v171 = vld [vmem:[%s1 + $0x3a0] sm:$0xff]
    %v172 = vld [vmem:[%s1 + $0x3a8] sm:$0xff]
    %v173 = vld [vmem:[%s1 + $0x3b0] sm:$0xff]
    %v174 = vld [vmem:[%s1 + $0x3b8] sm:$0xff]
    %v175 = vld [vmem:[%s1 + $0x3c0] sm:$0xff]
    %v176 = vld [vmem:[%s1 + $0x3c8] sm:$0xff]
    %v177 = vld [vmem:[%s1 + $0x3d0] sm:$0xff]
    %v178 = vld [vmem:[%s1 + $0x3d8] sm:$0xff]
    %v179 = vld [vmem:[%s1 + $0x3e0] sm:$0xff]
    %v180 = vld [vmem:[%s1 + $0x3e8] sm:$0xff]
    %v181 = vld [vmem:[%s1 + $0x3f0] sm:$0xff]
    %v182 = vld [vmem:[%s1 + $0x3f8] sm:$0xff]
    %v183 = vld [vmem:[%s1 + $0x400] sm:$0xff]
    %v184 = vld [vmem:[%s1 + $0x408] sm:$0xff]
    %v185 = vld [vmem:[%s1 + $0x410] sm:$0xff]
    %v186 = vld [vmem:[%s1 + $0x418] sm:$0xff]
    %v187 = vld [vmem:[%s1 + $0x420] sm:$0xff]
    %v188 = vld [vmem:[%s1 + $0x428] sm:$0xff]
    %v189 = vld [vmem:[%s1 + $0x430] sm:$0xff]
    %v190 = vld [vmem:[%s1 + $0x438] sm:$0xff]
    %v191 = vld [vmem:[%s1 + $0x440] sm:$0xff]
    %v192 = vld [vmem:[%s1 + $0x448] sm:$0xff]
    %v193 = vld [vmem:[%s1 + $0x450] sm:$0xff]
    %v194 = vld [vmem:[%s1 + $0x458] sm:$0xff]
    %v195 = vld [vmem:[%s1 + $0x460] sm:$0xff]
    %v196 = vld [vmem:[%s1 + $0x468] sm:$0xff]
    %v197 = vld [vmem:[%s1 + $0x470] sm:$0xff]
    %v198 = vld [vmem:[%s1 + $0x478] sm:$0xff]
    %v199 = vld [vmem:[%s2] sm:$0x3f]
    %v201 = vlaneseq
    %v202 = vshrl.u32 %v201, 7
    %v203 = vsub.s32 0, %v202
    %v204 = vrot.slane %v199, %v203
    %v205 = vlaneseq
    %v206 = vshrl.u32 %v205, 7
    %v207 = vsub.s32 1, %v206
    %v208 = vrot.slane %v199, %v207
    %v209 = vlaneseq
    %v210 = vshrl.u32 %v209, 7
    %v211 = vsub.s32 2, %v210
    %v212 = vrot.slane %v199, %v211
    %v213 = vlaneseq
    %v214 = vshrl.u32 %v213, 7
    %v215 = vsub.s32 3, %v214
    %v216 = vrot.slane %v199, %v215
    %v217 = vlaneseq
    %v218 = vshrl.u32 %v217, 7
    %v219 = vsub.s32 4, %v218
    %v220 = vrot.slane %v199, %v219
    %v221 = vlaneseq
    %v222 = vshrl.u32 %v221, 7
    %v223 = vsub.s32 5, %v222
    %v224 = vrot.slane %v199, %v223
    %vm231 = vcmask 523264
    %v233 = vsel %vm231, %v30, 0
    %v236 = vsel %vm231, %v32, 0
    %v239 = vsel %vm231, %v34, 0
    %v242 = vsel %vm231, %v36, 0
    %v245 = vsel %vm231, %v38, 0
    %v248 = vsel %vm231, %v40, 0
    %v251 = vsel %vm231, %v42, 0
    %v254 = vsel %vm231, %v44, 0
    %v257 = vsel %vm231, %v46, 0
    %v260 = vsel %vm231, %v48, 0
    %v263 = vsel %vm231, %v50, 0
    %v266 = vsel %vm231, %v52, 0
    %v269 = vsel %vm231, %v54, 0
    %271 = vmatprep.subr.mxu0 %v56
    %272 = vmatpush1.msra.mxu0 %v55
    %273 = vmatprep.subr.mxu0 %v62
    %274 = vmatpush1.msra.mxu0 %v61
    %275 = vmatprep.subr.mxu0 %v68
    %276 = vmatpush1.msra.mxu0 %v67
    %277 = vmatprep.subr.mxu0 %v74
    %278 = vmatpush1.msra.mxu0 %v73
    %279 = vmatprep.subr.mxu0 %v80
    %280 = vmatpush1.msra.mxu0 %v79
    %281 = vmatprep.subr.mxu0 %v86
    %282 = vmatpush1.msra.mxu0 %v85
    %283 = vmatprep.subr.mxu0 %v92
    %284 = vmatpush1.msra.mxu0 %v91
    %285 = vmatprep.subr.mxu0 %v98
    %286 = vmatpush1.msra.mxu0 %v97
    %287 = vmatprep.subr.mxu0 %v104
    %288 = vmatpush1.msra.mxu0 %v103
    %289 = vmatprep.subr.mxu0 %v110
    %290 = vmatpush1.msra.mxu0 %v109
    %291 = vmatprep.subr.mxu0 %v116
    %292 = vmatpush1.msra.mxu0 %v115
    %293 = vmatprep.subr.mxu0 %v122
    %294 = vmatpush1.msra.mxu0 %v121
    %295 = vmatprep.subr.mxu0 %v128
    %296 = vmatpush1.msra.mxu0 %v127
    %297 = vmatprep.subr.mxu0 %v134
    %298 = vmatpush1.msra.mxu0 %v133
    %299 = vmatprep.subr.mxu0 %v140
    %300 = vmatpush1.msra.mxu0 %v139
    %301 = vmatprep.subr.mxu0 %v146
    %302 = vmatpush1.msra.mxu0 %v145
    %303 = vmatprep.subr.mxu0 %v152
    %304 = vmatpush1.msra.mxu0 %v151
    %305 = vmatprep.subr.mxu0 %v158
    %306 = vmatpush1.msra.mxu0 %v157
    %307 = vmatprep.subr.mxu0 %v164
    %308 = vmatpush1.msra.mxu0 %v163
    %309 = vmatprep.subr.mxu0 %v170
    %310 = vmatpush1.msra.mxu0 %v169
    %311 = vmatprep.subr.mxu0 %v176
    %312 = vmatpush1.msra.mxu0 %v175
    %313 = vmatprep.subr.mxu0 %v182
    %314 = vmatpush1.msra.mxu0 %v181
    %315 = vmatprep.subr.mxu0 %v188
    %316 = vmatpush1.msra.mxu0 %v187
    %317 = vmatprep.subr.mxu0 %v194
    %318 = vmatpush1.msra.mxu0 %v193
    %319 = vmatprep.subr.mxu0 0.0
    %320 = vmatpush1.msra.mxu0 0.0
    %321 = vmatprep.subr.mxu0 0.0
    %322 = vmatpush1.msra.mxu0 0.0
    %323 = vmatprep.subr.mxu0 0.0
    %324 = vmatpush1.msra.mxu0 0.0
    %325 = vmatprep.subr.mxu0 0.0
    %326 = vmatpush1.msra.mxu0 0.0
    %327 = vmatprep.subr.mxu0 0.0
    %328 = vmatpush1.msra.mxu0 0.0
    %329 = vmatprep.subr.mxu0 0.0
    %330 = vmatpush1.msra.mxu0 0.0
    %331 = vmatprep.subr.mxu0 0.0
    %332 = vmatpush1.msra.mxu0 0.0
    %333 = vmatprep.subr.mxu0 0.0
    %334 = vmatpush1.msra.mxu0 0.0
    %335 = vmatprep.mubr.f32.mxu0 %v233
    %336 = vmatmul.mubr.f32.gmra.mrb[0].mxu0 %v29
    %v337 = vpop.f32.mrb[0].mxu0
    %v338 = vadd.f32 %v204, %v337
    %v339 = vpop.f32.mrb[0].mxu0
    %v340 = vadd.f32 %v208, %v339
    %341 = vmatprep.mubr.f32.mxu0 %v236
    %342 = vmatmul.mubr.f32.gmra.mrb[0].mxu0 %v31
    %v343 = vpop.f32.mrb[0].mxu0
    %v344 = vadd.f32 %v204, %v343
    %v345 = vpop.f32.mrb[0].mxu0
    %v346 = vadd.f32 %v208, %v345
    %347 = vmatprep.mubr.f32.mxu0 %v239
    %348 = vmatmul.mubr.f32.gmra.mrb[0].mxu0 %v33
    %v349 = vpop.f32.mrb[0].mxu0
    %v350 = vadd.f32 %v204, %v349
    %v351 = vpop.f32.mrb[0].mxu0
    %v352 = vadd.f32 %v208, %v351
    %353 = vmatprep.mubr.f32.mxu0 %v242
    %354 = vmatmul.mubr.f32.gmra.mrb[0].mxu0 %v35
    %v355 = vpop.f32.mrb[0].mxu0
    %v356 = vadd.f32 %v204, %v355
    %v357 = vpop.f32.mrb[0].mxu0
    %v358 = vadd.f32 %v208, %v357
    %359 = vmatprep.mubr.f32.mxu0 %v245
    %360 = vmatmul.mubr.f32.gmra.mrb[0].mxu0 %v37
    %v361 = vpop.f32.mrb[0].mxu0
    %v362 = vadd.f32 %v204, %v361
    %v363 = vpop.f32.mrb[0].mxu0
    %v364 = vadd.f32 %v208, %v363
    %365 = vmatprep.mubr.f32.mxu0 %v248
    %366 = vmatmul.mubr.f32.gmra.mrb[0].mxu0 %v39
    %v367 = vpop.f32.mrb[0].mxu0
    %v368 = vadd.f32 %v204, %v367
    %v369 = vpop.f32.mrb[0].mxu0
    %v370 = vadd.f32 %v208, %v369
    %371 = vmatprep.mubr.f32.mxu0 %v251
    %372 = vmatmul.mubr.f32.gmra.mrb[0].mxu0 %v41
    %v373 = vpop.f32.mrb[0].mxu0
    %v374 = vadd.f32 %v204, %v373
    %v375 = vpop.f32.mrb[0].mxu0
    %v376 = vadd.f32 %v208, %v375
    %377 = vmatprep.mubr.f32.mxu0 %v254
    %378 = vmatmul.mubr.f32.gmra.mrb[0].mxu0 %v43
    %v379 = vpop.f32.mrb[0].mxu0
    %v380 = vadd.f32 %v204, %v379
    %v381 = vpop.f32.mrb[0].mxu0
    %v382 = vadd.f32 %v208, %v381
    %383 = vmatprep.mubr.f32.mxu0 %v257
    %384 = vmatmul.mubr.f32.gmra.mrb[0].mxu0 %v45
    %v385 = vpop.f32.mrb[0].mxu0
    %v386 = vadd.f32 %v204, %v385
    %v387 = vpop.f32.mrb[0].mxu0
    %v388 = vadd.f32 %v208, %v387
    %389 = vmatprep.mubr.f32.mxu0 %v260
    %390 = vmatmul.mubr.f32.gmra.mrb[0].mxu0 %v47
    %v391 = vpop.f32.mrb[0].mxu0
    %v392 = vadd.f32 %v204, %v391
    %v393 = vpop.f32.mrb[0].mxu0
    %v394 = vadd.f32 %v208, %v393
    %395 = vmatprep.mubr.f32.mxu0 %v263
    %396 = vmatmul.mubr.f32.gmra.mrb[0].mxu0 %v49
    %v397 = vpop.f32.mrb[0].mxu0
    %v398 = vadd.f32 %v204, %v397
    %v399 = vpop.f32.mrb[0].mxu0
    %v400 = vadd.f32 %v208, %v399
    %401 = vmatprep.mubr.f32.mxu0 %v266
    %402 = vmatmul.mubr.f32.gmra.mrb[0].mxu0 %v51
    %v403 = vpop.f32.mrb[0].mxu0
    %v404 = vadd.f32 %v204, %v403
    %v405 = vpop.f32.mrb[0].mxu0
    %v406 = vadd.f32 %v208, %v405
    %407 = vmatprep.mubr.f32.mxu0 %v269
    %408 = vmatmul.mubr.f32.gmra.mrb[0].mxu0 %v53
    %v409 = vpop.f32.mrb[0].mxu0
    %v410 = vadd.f32 %v204, %v409
    %v411 = vpop.f32.mrb[0].mxu0
    %v412 = vadd.f32 %v208, %v411
    %413 = vdwg.mxu0
    %414 = vmatprep.subr.mxu0 %v58
    %415 = vmatpush1.msra.mxu0 %v57
    %416 = vmatprep.subr.mxu0 %v64
    %417 = vmatpush1.msra.mxu0 %v63
    %418 = vmatprep.subr.mxu0 %v70
    %419 = vmatpush1.msra.mxu0 %v69
    %420 = vmatprep.subr.mxu0 %v76
    %421 = vmatpush1.msra.mxu0 %v75
    %422 = vmatprep.subr.mxu0 %v82
    %423 = vmatpush1.msra.mxu0 %v81
    %424 = vmatprep.subr.mxu0 %v88
    %425 = vmatpush1.msra.mxu0 %v87
    %426 = vmatprep.subr.mxu0 %v94
    %427 = vmatpush1.msra.mxu0 %v93
    %428 = vmatprep.subr.mxu0 %v100
    %429 = vmatpush1.msra.mxu0 %v99
    %430 = vmatprep.subr.mxu0 %v106
    %431 = vmatpush1.msra.mxu0 %v105
    %432 = vmatprep.subr.mxu0 %v112
    %433 = vmatpush1.msra.mxu0 %v111
    %434 = vmatprep.subr.mxu0 %v118
    %435 = vmatpush1.msra.mxu0 %v117
    %436 = vmatprep.subr.mxu0 %v124
    %437 = vmatpush1.msra.mxu0 %v123
    %438 = vmatprep.subr.mxu0 %v130
    %439 = vmatpush1.msra.mxu0 %v129
    %440 = vmatprep.subr.mxu0 %v136
    %441 = vmatpush1.msra.mxu0 %v135
    %442 = vmatprep.subr.mxu0 %v142
    %443 = vmatpush1.msra.mxu0 %v141
    %444 = vmatprep.subr.mxu0 %v148
    %445 = vmatpush1.msra.mxu0 %v147
    %446 = vmatprep.subr.mxu0 %v154
    %447 = vmatpush1.msra.mxu0 %v153
    %448 = vmatprep.subr.mxu0 %v160
    %449 = vmatpush1.msra.mxu0 %v159
    %450 = vmatprep.subr.mxu0 %v166
    %451 = vmatpush1.msra.mxu0 %v165
    %452 = vmatprep.subr.mxu0 %v172
    %453 = vmatpush1.msra.mxu0 %v171
    %454 = vmatprep.subr.mxu0 %v178
    %455 = vmatpush1.msra.mxu0 %v177
    %456 = vmatprep.subr.mxu0 %v184
    %457 = vmatpush1.msra.mxu0 %v183
    %458 = vmatprep.subr.mxu0 %v190
    %459 = vmatpush1.msra.mxu0 %v189
    %460 = vmatprep.subr.mxu0 %v196
    %461 = vmatpush1.msra.mxu0 %v195
    %462 = vmatprep.subr.mxu0 0.0
    %463 = vmatpush1.msra.mxu0 0.0
    %464 = vmatprep.subr.mxu0 0.0
    %465 = vmatpush1.msra.mxu0 0.0
    %466 = vmatprep.subr.mxu0 0.0
    %467 = vmatpush1.msra.mxu0 0.0
    %468 = vmatprep.subr.mxu0 0.0
    %469 = vmatpush1.msra.mxu0 0.0
    %470 = vmatprep.subr.mxu0 0.0
    %471 = vmatpush1.msra.mxu0 0.0
    %472 = vmatprep.subr.mxu0 0.0
    %473 = vmatpush1.msra.mxu0 0.0
    %474 = vmatprep.subr.mxu0 0.0
    %475 = vmatpush1.msra.mxu0 0.0
    %476 = vmatprep.subr.mxu0 0.0
    %477 = vmatpush1.msra.mxu0 0.0
    %478 = vmatprep.mubr.f32.mxu0 %v233
    %479 = vmatmul.mubr.f32.gmra.mrb[0].mxu0 %v29
    %v480 = vpop.f32.mrb[0].mxu0
    %v481 = vadd.f32 %v212, %v480
    %v482 = vpop.f32.mrb[0].mxu0
    %v483 = vadd.f32 %v216, %v482
    %484 = vmatprep.mubr.f32.mxu0 %v236
    %485 = vmatmul.mubr.f32.gmra.mrb[0].mxu0 %v31
    %v486 = vpop.f32.mrb[0].mxu0
    %v487 = vadd.f32 %v212, %v486
    %v488 = vpop.f32.mrb[0].mxu0
    %v489 = vadd.f32 %v216, %v488
    %490 = vmatprep.mubr.f32.mxu0 %v239
    %491 = vmatmul.mubr.f32.gmra.mrb[0].mxu0 %v33
    %v492 = vpop.f32.mrb[0].mxu0
    %v493 = vadd.f32 %v212, %v492
    %v494 = vpop.f32.mrb[0].mxu0
    %v495 = vadd.f32 %v216, %v494
    %496 = vmatprep.mubr.f32.mxu0 %v242
    %497 = vmatmul.mubr.f32.gmra.mrb[0].mxu0 %v35
    %v498 = vpop.f32.mrb[0].mxu0
    %v499 = vadd.f32 %v212, %v498
    %v500 = vpop.f32.mrb[0].mxu0
    %v501 = vadd.f32 %v216, %v500
    %502 = vmatprep.mubr.f32.mxu0 %v245
    %503 = vmatmul.mubr.f32.gmra.mrb[0].mxu0 %v37
    %v504 = vpop.f32.mrb[0].mxu0
    %v505 = vadd.f32 %v212, %v504
    %v506 = vpop.f32.mrb[0].mxu0
    %v507 = vadd.f32 %v216, %v506
    %508 = vmatprep.mubr.f32.mxu0 %v248
    %509 = vmatmul.mubr.f32.gmra.mrb[0].mxu0 %v39
    %v510 = vpop.f32.mrb[0].mxu0
    %v511 = vadd.f32 %v212, %v510
    %v512 = vpop.f32.mrb[0].mxu0
    %v513 = vadd.f32 %v216, %v512
    %514 = vmatprep.mubr.f32.mxu0 %v251
    %515 = vmatmul.mubr.f32.gmra.mrb[0].mxu0 %v41
    %v516 = vpop.f32.mrb[0].mxu0
    %v517 = vadd.f32 %v212, %v516
    %v518 = vpop.f32.mrb[0].mxu0
    %v519 = vadd.f32 %v216, %v518
    %520 = vmatprep.mubr.f32.mxu0 %v254
    %521 = vmatmul.mubr.f32.gmra.mrb[0].mxu0 %v43
    %v522 = vpop.f32.mrb[0].mxu0
    %v523 = vadd.f32 %v212, %v522
    %v524 = vpop.f32.mrb[0].mxu0
    %v525 = vadd.f32 %v216, %v524
    %526 = vmatprep.mubr.f32.mxu0 %v257
    %527 = vmatmul.mubr.f32.gmra.mrb[0].mxu0 %v45
    %v528 = vpop.f32.mrb[0].mxu0
    %v529 = vadd.f32 %v212, %v528
    %v530 = vpop.f32.mrb[0].mxu0
    %v531 = vadd.f32 %v216, %v530
    %532 = vmatprep.mubr.f32.mxu0 %v260
    %533 = vmatmul.mubr.f32.gmra.mrb[0].mxu0 %v47
    %v534 = vpop.f32.mrb[0].mxu0
    %v535 = vadd.f32 %v212, %v534
    %v536 = vpop.f32.mrb[0].mxu0
    %v537 = vadd.f32 %v216, %v536
    %538 = vmatprep.mubr.f32.mxu0 %v263
    %539 = vmatmul.mubr.f32.gmra.mrb[0].mxu0 %v49
    %v540 = vpop.f32.mrb[0].mxu0
    %v541 = vadd.f32 %v212, %v540
    %v542 = vpop.f32.mrb[0].mxu0
    %v543 = vadd.f32 %v216, %v542
    %544 = vmatprep.mubr.f32.mxu0 %v266
    %545 = vmatmul.mubr.f32.gmra.mrb[0].mxu0 %v51
    %v546 = vpop.f32.mrb[0].mxu0
    %v547 = vadd.f32 %v212, %v546
    %v548 = vpop.f32.mrb[0].mxu0
    %v549 = vadd.f32 %v216, %v548
    %550 = vmatprep.mubr.f32.mxu0 %v269
    %551 = vmatmul.mubr.f32.gmra.mrb[0].mxu0 %v53
    %v552 = vpop.f32.mrb[0].mxu0
    %v553 = vadd.f32 %v212, %v552
    %v554 = vpop.f32.mrb[0].mxu0
    %v555 = vadd.f32 %v216, %v554
    %556 = vdwg.mxu0
    %557 = vmatprep.subr.mxu0 %v60
    %558 = vmatpush1.msra.mxu0 %v59
    %559 = vmatprep.subr.mxu0 %v66
    %560 = vmatpush1.msra.mxu0 %v65
    %561 = vmatprep.subr.mxu0 %v72
    %562 = vmatpush1.msra.mxu0 %v71
    %563 = vmatprep.subr.mxu0 %v78
    %564 = vmatpush1.msra.mxu0 %v77
    %565 = vmatprep.subr.mxu0 %v84
    %566 = vmatpush1.msra.mxu0 %v83
    %567 = vmatprep.subr.mxu0 %v90
    %568 = vmatpush1.msra.mxu0 %v89
    %569 = vmatprep.subr.mxu0 %v96
    %570 = vmatpush1.msra.mxu0 %v95
    %571 = vmatprep.subr.mxu0 %v102
    %572 = vmatpush1.msra.mxu0 %v101
    %573 = vmatprep.subr.mxu0 %v108
    %574 = vmatpush1.msra.mxu0 %v107
    %575 = vmatprep.subr.mxu0 %v114
    %576 = vmatpush1.msra.mxu0 %v113
    %577 = vmatprep.subr.mxu0 %v120
    %578 = vmatpush1.msra.mxu0 %v119
    %579 = vmatprep.subr.mxu0 %v126
    %580 = vmatpush1.msra.mxu0 %v125
    %581 = vmatprep.subr.mxu0 %v132
    %582 = vmatpush1.msra.mxu0 %v131
    %583 = vmatprep.subr.mxu0 %v138
    %584 = vmatpush1.msra.mxu0 %v137
    %585 = vmatprep.subr.mxu0 %v144
    %586 = vmatpush1.msra.mxu0 %v143
    %587 = vmatprep.subr.mxu0 %v150
    %588 = vmatpush1.msra.mxu0 %v149
    %589 = vmatprep.subr.mxu0 %v156
    %590 = vmatpush1.msra.mxu0 %v155
    %591 = vmatprep.subr.mxu0 %v162
    %592 = vmatpush1.msra.mxu0 %v161
    %593 = vmatprep.subr.mxu0 %v168
    %594 = vmatpush1.msra.mxu0 %v167
    %595 = vmatprep.subr.mxu0 %v174
    %596 = vmatpush1.msra.mxu0 %v173
    %597 = vmatprep.subr.mxu0 %v180
    %598 = vmatpush1.msra.mxu0 %v179
    %599 = vmatprep.subr.mxu0 %v186
    %600 = vmatpush1.msra.mxu0 %v185
    %601 = vmatprep.subr.mxu0 %v192
    %602 = vmatpush1.msra.mxu0 %v191
    %603 = vmatprep.subr.mxu0 %v198
    %604 = vmatpush1.msra.mxu0 %v197
    %605 = vmatprep.subr.mxu0 0.0
    %606 = vmatpush1.msra.mxu0 0.0
    %607 = vmatprep.subr.mxu0 0.0
    %608 = vmatpush1.msra.mxu0 0.0
    %609 = vmatprep.subr.mxu0 0.0
    %610 = vmatpush1.msra.mxu0 0.0
    %611 = vmatprep.subr.mxu0 0.0
    %612 = vmatpush1.msra.mxu0 0.0
    %613 = vmatprep.subr.mxu0 0.0
    %614 = vmatpush1.msra.mxu0 0.0
    %615 = vmatprep.subr.mxu0 0.0
    %616 = vmatpush1.msra.mxu0 0.0
    %617 = vmatprep.subr.mxu0 0.0
    %618 = vmatpush1.msra.mxu0 0.0
    %619 = vmatprep.subr.mxu0 0.0
    %620 = vmatpush1.msra.mxu0 0.0
    %621 = vmatprep.mubr.f32.mxu0 %v233
    %622 = vmatmul.mubr.f32.gmra.mrb[0].mxu0 %v29
    %v623 = vpop.f32.mrb[0].mxu0
    %v624 = vadd.f32 %v220, %v623
    %v625 = vpop.f32.mrb[0].mxu0
    %v626 = vadd.f32 %v224, %v625
    %627 = vmatprep.mubr.f32.mxu0 %v236
    %628 = vmatmul.mubr.f32.gmra.mrb[0].mxu0 %v31
    %v629 = vpop.f32.mrb[0].mxu0
    %v630 = vadd.f32 %v220, %v629
    %v631 = vpop.f32.mrb[0].mxu0
    %v632 = vadd.f32 %v224, %v631
    %633 = vmatprep.mubr.f32.mxu0 %v239
    %634 = vmatmul.mubr.f32.gmra.mrb[0].mxu0 %v33
    %v635 = vpop.f32.mrb[0].mxu0
    %v636 = vadd.f32 %v220, %v635
    %v637 = vpop.f32.mrb[0].mxu0
    %v638 = vadd.f32 %v224, %v637
    %639 = vmatprep.mubr.f32.mxu0 %v242
    %640 = vmatmul.mubr.f32.gmra.mrb[0].mxu0 %v35
    %v641 = vpop.f32.mrb[0].mxu0
    %v642 = vadd.f32 %v220, %v641
    %v643 = vpop.f32.mrb[0].mxu0
    %v644 = vadd.f32 %v224, %v643
    %645 = vmatprep.mubr.f32.mxu0 %v245
    %646 = vmatmul.mubr.f32.gmra.mrb[0].mxu0 %v37
    %v647 = vpop.f32.mrb[0].mxu0
    %v648 = vadd.f32 %v220, %v647
    %v649 = vpop.f32.mrb[0].mxu0
    %v650 = vadd.f32 %v224, %v649
    %651 = vmatprep.mubr.f32.mxu0 %v248
    %652 = vmatmul.mubr.f32.gmra.mrb[0].mxu0 %v39
    %v653 = vpop.f32.mrb[0].mxu0
    %v654 = vadd.f32 %v220, %v653
    %v655 = vpop.f32.mrb[0].mxu0
    %v656 = vadd.f32 %v224, %v655
    %657 = vmatprep.mubr.f32.mxu0 %v251
    %658 = vmatmul.mubr.f32.gmra.mrb[0].mxu0 %v41
    %v659 = vpop.f32.mrb[0].mxu0
    %v660 = vadd.f32 %v220, %v659
    %v661 = vpop.f32.mrb[0].mxu0
    %v662 = vadd.f32 %v224, %v661
    %663 = vmatprep.mubr.f32.mxu0 %v254
    %664 = vmatmul.mubr.f32.gmra.mrb[0].mxu0 %v43
    %v665 = vpop.f32.mrb[0].mxu0
    %v666 = vadd.f32 %v220, %v665
    %v667 = vpop.f32.mrb[0].mxu0
    %v668 = vadd.f32 %v224, %v667
    %669 = vmatprep.mubr.f32.mxu0 %v257
    %670 = vmatmul.mubr.f32.gmra.mrb[0].mxu0 %v45
    %v671 = vpop.f32.mrb[0].mxu0
    %v672 = vadd.f32 %v220, %v671
    %v673 = vpop.f32.mrb[0].mxu0
    %v674 = vadd.f32 %v224, %v673
    %675 = vmatprep.mubr.f32.mxu0 %v260
    %676 = vmatmul.mubr.f32.gmra.mrb[0].mxu0 %v47
    %v677 = vpop.f32.mrb[0].mxu0
    %v678 = vadd.f32 %v220, %v677
    %v679 = vpop.f32.mrb[0].mxu0
    %v680 = vadd.f32 %v224, %v679
    %681 = vmatprep.mubr.f32.mxu0 %v263
    %682 = vmatmul.mubr.f32.gmra.mrb[0].mxu0 %v49
    %v683 = vpop.f32.mrb[0].mxu0
    %v684 = vadd.f32 %v220, %v683
    %v685 = vpop.f32.mrb[0].mxu0
    %v686 = vadd.f32 %v224, %v685
    %687 = vmatprep.mubr.f32.mxu0 %v266
    %688 = vmatmul.mubr.f32.gmra.mrb[0].mxu0 %v51
    %v689 = vpop.f32.mrb[0].mxu0
    %v690 = vadd.f32 %v220, %v689
    %v691 = vpop.f32.mrb[0].mxu0
    %v692 = vadd.f32 %v224, %v691
    %693 = vmatprep.mubr.f32.mxu0 %v269
    %694 = vmatmul.mubr.f32.gmra.mrb[0].mxu0 %v53
    %v695 = vpop.f32.mrb[0].mxu0
    %v696 = vadd.f32 %v220, %v695
    %v697 = vpop.f32.mrb[0].mxu0
    %v698 = vadd.f32 %v224, %v697
    %699 = vdwg.mxu0
    %v700 = vadd.f32 %v338, %v340
    %v701 = vadd.f32 %v700, %v481
    %v702 = vadd.f32 %v701, %v483
    %v703 = vadd.f32 %v702, %v624
    %v704 = vadd.f32 %v703, %v626
    %705 = vadd.xlane.f32.xlu0 %v704
    %v706 = vpop.xlane.xlu0 %705
    %v707 = vadd.f32 %v344, %v346
    %v708 = vadd.f32 %v707, %v487
    %v709 = vadd.f32 %v708, %v489
    %v710 = vadd.f32 %v709, %v630
    %v711 = vadd.f32 %v710, %v632
    %712 = vadd.xlane.f32.xlu0 %v711
    %v713 = vpop.xlane.xlu0 %712
    %v714 = vadd.f32 %v350, %v352
    %v715 = vadd.f32 %v714, %v493
    %v716 = vadd.f32 %v715, %v495
    %v717 = vadd.f32 %v716, %v636
    %v718 = vadd.f32 %v717, %v638
    %719 = vadd.xlane.f32.xlu0 %v718
    %v720 = vpop.xlane.xlu0 %719
    %v721 = vadd.f32 %v356, %v358
    %v722 = vadd.f32 %v721, %v499
    %v723 = vadd.f32 %v722, %v501
    %v724 = vadd.f32 %v723, %v642
    %v725 = vadd.f32 %v724, %v644
    %726 = vadd.xlane.f32.xlu0 %v725
    %v727 = vpop.xlane.xlu0 %726
    %v728 = vadd.f32 %v362, %v364
    %v729 = vadd.f32 %v728, %v505
    %v730 = vadd.f32 %v729, %v507
    %v731 = vadd.f32 %v730, %v648
    %v732 = vadd.f32 %v731, %v650
    %733 = vadd.xlane.f32.xlu0 %v732
    %v734 = vpop.xlane.xlu0 %733
    %v735 = vadd.f32 %v368, %v370
    %v736 = vadd.f32 %v735, %v511
    %v737 = vadd.f32 %v736, %v513
    %v738 = vadd.f32 %v737, %v654
    %v739 = vadd.f32 %v738, %v656
    %740 = vadd.xlane.f32.xlu0 %v739
    %v741 = vpop.xlane.xlu0 %740
    %v742 = vadd.f32 %v374, %v376
    %v743 = vadd.f32 %v742, %v517
    %v744 = vadd.f32 %v743, %v519
    %v745 = vadd.f32 %v744, %v660
    %v746 = vadd.f32 %v745, %v662
    %747 = vadd.xlane.f32.xlu0 %v746
    %v748 = vpop.xlane.xlu0 %747
    %v749 = vadd.f32 %v380, %v382
    %v750 = vadd.f32 %v749, %v523
    %v751 = vadd.f32 %v750, %v525
    %v752 = vadd.f32 %v751, %v666
    %v753 = vadd.f32 %v752, %v668
    %754 = vadd.xlane.f32.xlu0 %v753
    %v755 = vpop.xlane.xlu0 %754
    %v756 = vadd.f32 %v386, %v388
    %v757 = vadd.f32 %v756, %v529
    %v758 = vadd.f32 %v757, %v531
    %v759 = vadd.f32 %v758, %v672
    %v760 = vadd.f32 %v759, %v674
    %761 = vadd.xlane.f32.xlu0 %v760
    %v762 = vpop.xlane.xlu0 %761
    %v763 = vadd.f32 %v392, %v394
    %v764 = vadd.f32 %v763, %v535
    %v765 = vadd.f32 %v764, %v537
    %v766 = vadd.f32 %v765, %v678
    %v767 = vadd.f32 %v766, %v680
    %768 = vadd.xlane.f32.xlu0 %v767
    %v769 = vpop.xlane.xlu0 %768
    %v770 = vadd.f32 %v398, %v400
    %v771 = vadd.f32 %v770, %v541
    %v772 = vadd.f32 %v771, %v543
    %v773 = vadd.f32 %v772, %v684
    %v774 = vadd.f32 %v773, %v686
    %775 = vadd.xlane.f32.xlu0 %v774
    %v776 = vpop.xlane.xlu0 %775
    %v777 = vadd.f32 %v404, %v406
    %v778 = vadd.f32 %v777, %v547
    %v779 = vadd.f32 %v778, %v549
    %v780 = vadd.f32 %v779, %v690
    %v781 = vadd.f32 %v780, %v692
    %782 = vadd.xlane.f32.xlu0 %v781
    %v783 = vpop.xlane.xlu0 %782
    %vm784 = vcmask 1041408
    %v785 = vsel %vm784, %v410, 0.0
    %v786 = vsel %vm784, %v412, 0.0
    %v787 = vadd.f32 %v785, %v786
    %v788 = vsel %vm784, %v553, 0.0
    %v789 = vadd.f32 %v787, %v788
    %v790 = vsel %vm784, %v555, 0.0
    %v791 = vadd.f32 %v789, %v790
    %v792 = vsel %vm784, %v696, 0.0
    %v793 = vadd.f32 %v791, %v792
    %v794 = vsel %vm784, %v698, 0.0
    %v795 = vadd.f32 %v793, %v794
    %796 = vadd.xlane.f32.xlu0 %v795
    %v797 = vpop.xlane.xlu0 %796
    %v798 = vrcp.pop 768.0
    %v799 = vmul.f32 %v706, %v798
    %v800 = vmul.f32 %v713, %v798
    %v801 = vmul.f32 %v720, %v798
    %v802 = vmul.f32 %v727, %v798
    %v803 = vmul.f32 %v734, %v798
    %v804 = vmul.f32 %v741, %v798
    %v805 = vmul.f32 %v748, %v798
    %v806 = vmul.f32 %v755, %v798
    %v807 = vmul.f32 %v762, %v798
    %v808 = vmul.f32 %v769, %v798
    %v809 = vmul.f32 %v776, %v798
    %v810 = vmul.f32 %v783, %v798
    %v811 = vmul.f32 %v797, %v798
    %v812 = vmul.f32 %v338, %v338
    %v813 = vmul.f32 %v340, %v340
    %v814 = vmul.f32 %v481, %v481
    %v815 = vmul.f32 %v483, %v483
    %v816 = vmul.f32 %v624, %v624
    %v817 = vmul.f32 %v626, %v626
    %v818 = vmul.f32 %v344, %v344
    %v819 = vmul.f32 %v346, %v346
    %v820 = vmul.f32 %v487, %v487
    %v821 = vmul.f32 %v489, %v489
    %v822 = vmul.f32 %v630, %v630
    %v823 = vmul.f32 %v632, %v632
    %v824 = vmul.f32 %v350, %v350
    %v825 = vmul.f32 %v352, %v352
    %v826 = vmul.f32 %v493, %v493
    %v827 = vmul.f32 %v495, %v495
    %v828 = vmul.f32 %v636, %v636
    %v829 = vmul.f32 %v638, %v638
    %v830 = vmul.f32 %v356, %v356
    %v831 = vmul.f32 %v358, %v358
    %v832 = vmul.f32 %v499, %v499
    %v833 = vmul.f32 %v501, %v501
    %v834 = vmul.f32 %v642, %v642
    %v835 = vmul.f32 %v644, %v644
    %v836 = vmul.f32 %v362, %v362
    %v837 = vmul.f32 %v364, %v364
    %v838 = vmul.f32 %v505, %v505
    %v839 = vmul.f32 %v507, %v507
    %v840 = vmul.f32 %v648, %v648
    %v841 = vmul.f32 %v650, %v650
    %v842 = vmul.f32 %v368, %v368
    %v843 = vmul.f32 %v370, %v370
    %v844 = vmul.f32 %v511, %v511
    %v845 = vmul.f32 %v513, %v513
    %v846 = vmul.f32 %v654, %v654
    %v847 = vmul.f32 %v656, %v656
    %v848 = vmul.f32 %v374, %v374
    %v849 = vmul.f32 %v376, %v376
    %v850 = vmul.f32 %v517, %v517
    %v851 = vmul.f32 %v519, %v519
    %v852 = vmul.f32 %v660, %v660
    %v853 = vmul.f32 %v662, %v662
    %v854 = vmul.f32 %v380, %v380
    %v855 = vmul.f32 %v382, %v382
    %v856 = vmul.f32 %v523, %v523
    %v857 = vmul.f32 %v525, %v525
    %v858 = vmul.f32 %v666, %v666
    %v859 = vmul.f32 %v668, %v668
    %v860 = vmul.f32 %v386, %v386
    %v861 = vmul.f32 %v388, %v388
    %v862 = vmul.f32 %v529, %v529
    %v863 = vmul.f32 %v531, %v531
    %v864 = vmul.f32 %v672, %v672
    %v865 = vmul.f32 %v674, %v674
    %v866 = vmul.f32 %v392, %v392
    %v867 = vmul.f32 %v394, %v394
    %v868 = vmul.f32 %v535, %v535
    %v869 = vmul.f32 %v537, %v537
    %v870 = vmul.f32 %v678, %v678
    %v871 = vmul.f32 %v680, %v680
    %v872 = vmul.f32 %v398, %v398
    %v873 = vmul.f32 %v400, %v400
    %v874 = vmul.f32 %v541, %v541
    %v875 = vmul.f32 %v543, %v543
    %v876 = vmul.f32 %v684, %v684
    %v877 = vmul.f32 %v686, %v686
    %v878 = vmul.f32 %v404, %v404
    %v879 = vmul.f32 %v406, %v406
    %v880 = vmul.f32 %v547, %v547
    %v881 = vmul.f32 %v549, %v549
    %v882 = vmul.f32 %v690, %v690
    %v883 = vmul.f32 %v692, %v692
    %v884 = vmul.f32 %v410, %v410
    %v885 = vmul.f32 %v412, %v412
    %v886 = vmul.f32 %v553, %v553
    %v887 = vmul.f32 %v555, %v555
    %v888 = vmul.f32 %v696, %v696
    %v889 = vmul.f32 %v698, %v698
    %v890 = vadd.f32 %v812, %v813
    %v891 = vadd.f32 %v890, %v814
    %v892 = vadd.f32 %v891, %v815
    %v893 = vadd.f32 %v892, %v816
    %v894 = vadd.f32 %v893, %v817
    %895 = vadd.xlane.f32.xlu0 %v894
    %v896 = vpop.xlane.xlu0 %895
    %v897 = vadd.f32 %v818, %v819
    %v898 = vadd.f32 %v897, %v820
    %v899 = vadd.f32 %v898, %v821
    %v900 = vadd.f32 %v899, %v822
    %v901 = vadd.f32 %v900, %v823
    %902 = vadd.xlane.f32.xlu0 %v901
    %v903 = vpop.xlane.xlu0 %902
    %v904 = vadd.f32 %v824, %v825
    %v905 = vadd.f32 %v904, %v826
    %v906 = vadd.f32 %v905, %v827
    %v907 = vadd.f32 %v906, %v828
    %v908 = vadd.f32 %v907, %v829
    %909 = vadd.xlane.f32.xlu0 %v908
    %v910 = vpop.xlane.xlu0 %909
    %v911 = vadd.f32 %v830, %v831
    %v912 = vadd.f32 %v911, %v832
    %v913 = vadd.f32 %v912, %v833
    %v914 = vadd.f32 %v913, %v834
    %v915 = vadd.f32 %v914, %v835
    %916 = vadd.xlane.f32.xlu0 %v915
    %v917 = vpop.xlane.xlu0 %916
    %v918 = vadd.f32 %v836, %v837
    %v919 = vadd.f32 %v918, %v838
    %v920 = vadd.f32 %v919, %v839
    %v921 = vadd.f32 %v920, %v840
    %v922 = vadd.f32 %v921, %v841
    %923 = vadd.xlane.f32.xlu0 %v922
    %v924 = vpop.xlane.xlu0 %923
    %v925 = vadd.f32 %v842, %v843
    %v926 = vadd.f32 %v925, %v844
    %v927 = vadd.f32 %v926, %v845
    %v928 = vadd.f32 %v927, %v846
    %v929 = vadd.f32 %v928, %v847
    %930 = vadd.xlane.f32.xlu0 %v929
    %v931 = vpop.xlane.xlu0 %930
    %v932 = vadd.f32 %v848, %v849
    %v933 = vadd.f32 %v932, %v850
    %v934 = vadd.f32 %v933, %v851
    %v935 = vadd.f32 %v934, %v852
    %v936 = vadd.f32 %v935, %v853
    %937 = vadd.xlane.f32.xlu0 %v936
    %v938 = vpop.xlane.xlu0 %937
    %v939 = vadd.f32 %v854, %v855
    %v940 = vadd.f32 %v939, %v856
    %v941 = vadd.f32 %v940, %v857
    %v942 = vadd.f32 %v941, %v858
    %v943 = vadd.f32 %v942, %v859
    %944 = vadd.xlane.f32.xlu0 %v943
    %v945 = vpop.xlane.xlu0 %944
    %v946 = vadd.f32 %v860, %v861
    %v947 = vadd.f32 %v946, %v862
    %v948 = vadd.f32 %v947, %v863
    %v949 = vadd.f32 %v948, %v864
    %v950 = vadd.f32 %v949, %v865
    %951 = vadd.xlane.f32.xlu0 %v950
    %v952 = vpop.xlane.xlu0 %951
    %v953 = vadd.f32 %v866, %v867
    %v954 = vadd.f32 %v953, %v868
    %v955 = vadd.f32 %v954, %v869
    %v956 = vadd.f32 %v955, %v870
    %v957 = vadd.f32 %v956, %v871
    %958 = vadd.xlane.f32.xlu0 %v957
    %v959 = vpop.xlane.xlu0 %958
    %v960 = vadd.f32 %v872, %v873
    %v961 = vadd.f32 %v960, %v874
    %v962 = vadd.f32 %v961, %v875
    %v963 = vadd.f32 %v962, %v876
    %v964 = vadd.f32 %v963, %v877
    %965 = vadd.xlane.f32.xlu0 %v964
    %v966 = vpop.xlane.xlu0 %965
    %v967 = vadd.f32 %v878, %v879
    %v968 = vadd.f32 %v967, %v880
    %v969 = vadd.f32 %v968, %v881
    %v970 = vadd.f32 %v969, %v882
    %v971 = vadd.f32 %v970, %v883
    %972 = vadd.xlane.f32.xlu0 %v971
    %v973 = vpop.xlane.xlu0 %972
    %v974 = vsel %vm784, %v884, 0.0
    %v975 = vsel %vm784, %v885, 0.0
    %v976 = vadd.f32 %v974, %v975
    %v977 = vsel %vm784, %v886, 0.0
    %v978 = vadd.f32 %v976, %v977
    %v979 = vsel %vm784, %v887, 0.0
    %v980 = vadd.f32 %v978, %v979
    %v981 = vsel %vm784, %v888, 0.0
    %v982 = vadd.f32 %v980, %v981
    %v983 = vsel %vm784, %v889, 0.0
    %v984 = vadd.f32 %v982, %v983
    %985 = vadd.xlane.f32.xlu0 %v984
    %v986 = vpop.xlane.xlu0 %985
    %v987 = vmul.f32 %v896, %v798
    %v988 = vmul.f32 %v903, %v798
    %v989 = vmul.f32 %v910, %v798
    %v990 = vmul.f32 %v917, %v798
    %v991 = vmul.f32 %v924, %v798
    %v992 = vmul.f32 %v931, %v798
    %v993 = vmul.f32 %v938, %v798
    %v994 = vmul.f32 %v945, %v798
    %v995 = vmul.f32 %v952, %v798
    %v996 = vmul.f32 %v959, %v798
    %v997 = vmul.f32 %v966, %v798
    %v998 = vmul.f32 %v973, %v798
    %v999 = vmul.f32 %v986, %v798
    %v1000 = vmul.f32 %v799, %v799
    %v1001 = vmul.f32 %v800, %v800
    %v1002 = vmul.f32 %v801, %v801
    %v1003 = vmul.f32 %v802, %v802
    %v1004 = vmul.f32 %v803, %v803
    %v1005 = vmul.f32 %v804, %v804
    %v1006 = vmul.f32 %v805, %v805
    %v1007 = vmul.f32 %v806, %v806
    %v1008 = vmul.f32 %v807, %v807
    %v1009 = vmul.f32 %v808, %v808
    %v1010 = vmul.f32 %v809, %v809
    %v1011 = vmul.f32 %v810, %v810
    %v1012 = vmul.f32 %v811, %v811
    %v1013 = vsub.f32 %v987, %v1000
    %v1014 = vsub.f32 %v988, %v1001
    %v1015 = vsub.f32 %v989, %v1002
    %v1016 = vsub.f32 %v990, %v1003
    %v1017 = vsub.f32 %v991, %v1004
    %v1018 = vsub.f32 %v992, %v1005
    %v1019 = vsub.f32 %v993, %v1006
    %v1020 = vsub.f32 %v994, %v1007
    %v1021 = vsub.f32 %v995, %v1008
    %v1022 = vsub.f32 %v996, %v1009
    %v1023 = vsub.f32 %v997, %v1010
    %v1024 = vsub.f32 %v998, %v1011
    %v1025 = vsub.f32 %v999, %v1012
    %v1026 = vsub.f32 %v338, %v799
    %v1027 = vsub.f32 %v340, %v799
    %v1028 = vsub.f32 %v481, %v799
    %v1029 = vsub.f32 %v483, %v799
    %v1030 = vsub.f32 %v624, %v799
    %v1031 = vsub.f32 %v626, %v799
    %v1032 = vsub.f32 %v344, %v800
    %v1033 = vsub.f32 %v346, %v800
    %v1034 = vsub.f32 %v487, %v800
    %v1035 = vsub.f32 %v489, %v800
    %v1036 = vsub.f32 %v630, %v800
    %v1037 = vsub.f32 %v632, %v800
    %v1038 = vsub.f32 %v350, %v801
    %v1039 = vsub.f32 %v352, %v801
    %v1040 = vsub.f32 %v493, %v801
    %v1041 = vsub.f32 %v495, %v801
    %v1042 = vsub.f32 %v636, %v801
    %v1043 = vsub.f32 %v638, %v801
    %v1044 = vsub.f32 %v356, %v802
    %v1045 = vsub.f32 %v358, %v802
    %v1046 = vsub.f32 %v499, %v802
    %v1047 = vsub.f32 %v501, %v802
    %v1048 = vsub.f32 %v642, %v802
    %v1049 = vsub.f32 %v644, %v802
    %v1050 = vsub.f32 %v362, %v803
    %v1051 = vsub.f32 %v364, %v803
    %v1052 = vsub.f32 %v505, %v803
    %v1053 = vsub.f32 %v507, %v803
    %v1054 = vsub.f32 %v648, %v803
    %v1055 = vsub.f32 %v650, %v803
    %v1056 = vsub.f32 %v368, %v804
    %v1057 = vsub.f32 %v370, %v804
    %v1058 = vsub.f32 %v511, %v804
    %v1059 = vsub.f32 %v513, %v804
    %v1060 = vsub.f32 %v654, %v804
    %v1061 = vsub.f32 %v656, %v804
    %v1062 = vsub.f32 %v374, %v805
    %v1063 = vsub.f32 %v376, %v805
    %v1064 = vsub.f32 %v517, %v805
    %v1065 = vsub.f32 %v519, %v805
    %v1066 = vsub.f32 %v660, %v805
    %v1067 = vsub.f32 %v662, %v805
    %v1068 = vsub.f32 %v380, %v806
    %v1069 = vsub.f32 %v382, %v806
    %v1070 = vsub.f32 %v523, %v806
    %v1071 = vsub.f32 %v525, %v806
    %v1072 = vsub.f32 %v666, %v806
    %v1073 = vsub.f32 %v668, %v806
    %v1074 = vsub.f32 %v386, %v807
    %v1075 = vsub.f32 %v388, %v807
    %v1076 = vsub.f32 %v529, %v807
    %v1077 = vsub.f32 %v531, %v807
    %v1078 = vsub.f32 %v672, %v807
    %v1079 = vsub.f32 %v674, %v807
    %v1080 = vsub.f32 %v392, %v808
    %v1081 = vsub.f32 %v394, %v808
    %v1082 = vsub.f32 %v535, %v808
    %v1083 = vsub.f32 %v537, %v808
    %v1084 = vsub.f32 %v678, %v808
    %v1085 = vsub.f32 %v680, %v808
    %v1086 = vsub.f32 %v398, %v809
    %v1087 = vsub.f32 %v400, %v809
    %v1088 = vsub.f32 %v541, %v809
    %v1089 = vsub.f32 %v543, %v809
    %v1090 = vsub.f32 %v684, %v809
    %v1091 = vsub.f32 %v686, %v809
    %v1092 = vsub.f32 %v404, %v810
    %v1093 = vsub.f32 %v406, %v810
    %v1094 = vsub.f32 %v547, %v810
    %v1095 = vsub.f32 %v549, %v810
    %v1096 = vsub.f32 %v690, %v810
    %v1097 = vsub.f32 %v692, %v810
    %v1098 = vsub.f32 %v410, %v811
    %v1099 = vsub.f32 %v412, %v811
    %v1100 = vsub.f32 %v553, %v811
    %v1101 = vsub.f32 %v555, %v811
    %v1102 = vsub.f32 %v696, %v811
    %v1103 = vsub.f32 %v698, %v811
    %v1104 = vadd.f32 %v1013, 1e-05
    %v1105 = vadd.f32 %v1014, 1e-05
    %v1106 = vadd.f32 %v1015, 1e-05
    %v1107 = vadd.f32 %v1016, 1e-05
    %v1108 = vadd.f32 %v1017, 1e-05
    %v1109 = vadd.f32 %v1018, 1e-05
    %v1110 = vadd.f32 %v1019, 1e-05
    %v1111 = vadd.f32 %v1020, 1e-05
    %v1112 = vadd.f32 %v1021, 1e-05
    %v1113 = vadd.f32 %v1022, 1e-05
    %v1114 = vadd.f32 %v1023, 1e-05
    %v1115 = vadd.f32 %v1024, 1e-05
    %v1116 = vadd.f32 %v1025, 1e-05
    %v1117 = vrsqrt.pop %v1104
    %v1118 = vrsqrt.pop %v1105
    %v1119 = vrsqrt.pop %v1106
    %v1120 = vrsqrt.pop %v1107
    %v1121 = vrsqrt.pop %v1108
    %v1122 = vrsqrt.pop %v1109
    %v1123 = vrsqrt.pop %v1110
    %v1124 = vrsqrt.pop %v1111
    %v1125 = vrsqrt.pop %v1112
    %v1126 = vrsqrt.pop %v1113
    %v1127 = vrsqrt.pop %v1114
    %v1128 = vrsqrt.pop %v1115
    %v1129 = vrsqrt.pop %v1116
    %v1130 = vmul.f32 %v1026, %v1117
    %v1131 = vmul.f32 %v1027, %v1117
    %v1132 = vmul.f32 %v1028, %v1117
    %v1133 = vmul.f32 %v1029, %v1117
    %v1134 = vmul.f32 %v1030, %v1117
    %v1135 = vmul.f32 %v1031, %v1117
    %v1136 = vmul.f32 %v1032, %v1118
    %v1137 = vmul.f32 %v1033, %v1118
    %v1138 = vmul.f32 %v1034, %v1118
    %v1139 = vmul.f32 %v1035, %v1118
    %v1140 = vmul.f32 %v1036, %v1118
    %v1141 = vmul.f32 %v1037, %v1118
    %v1142 = vmul.f32 %v1038, %v1119
    %v1143 = vmul.f32 %v1039, %v1119
    %v1144 = vmul.f32 %v1040, %v1119
    %v1145 = vmul.f32 %v1041, %v1119
    %v1146 = vmul.f32 %v1042, %v1119
    %v1147 = vmul.f32 %v1043, %v1119
    %v1148 = vmul.f32 %v1044, %v1120
    %v1149 = vmul.f32 %v1045, %v1120
    %v1150 = vmul.f32 %v1046, %v1120
    %v1151 = vmul.f32 %v1047, %v1120
    %v1152 = vmul.f32 %v1048, %v1120
    %v1153 = vmul.f32 %v1049, %v1120
    %v1154 = vmul.f32 %v1050, %v1121
    %v1155 = vmul.f32 %v1051, %v1121
    %v1156 = vmul.f32 %v1052, %v1121
    %v1157 = vmul.f32 %v1053, %v1121
    %v1158 = vmul.f32 %v1054, %v1121
    %v1159 = vmul.f32 %v1055, %v1121
    %v1160 = vmul.f32 %v1056, %v1122
    %v1161 = vmul.f32 %v1057, %v1122
    %v1162 = vmul.f32 %v1058, %v1122
    %v1163 = vmul.f32 %v1059, %v1122
    %v1164 = vmul.f32 %v1060, %v1122
    %v1165 = vmul.f32 %v1061, %v1122
    %v1166 = vmul.f32 %v1062, %v1123
    %v1167 = vmul.f32 %v1063, %v1123
    %v1168 = vmul.f32 %v1064, %v1123
    %v1169 = vmul.f32 %v1065, %v1123
    %v1170 = vmul.f32 %v1066, %v1123
    %v1171 = vmul.f32 %v1067, %v1123
    %v1172 = vmul.f32 %v1068, %v1124
    %v1173 = vmul.f32 %v1069, %v1124
    %v1174 = vmul.f32 %v1070, %v1124
    %v1175 = vmul.f32 %v1071, %v1124
    %v1176 = vmul.f32 %v1072, %v1124
    %v1177 = vmul.f32 %v1073, %v1124
    %v1178 = vmul.f32 %v1074, %v1125
    %v1179 = vmul.f32 %v1075, %v1125
    %v1180 = vmul.f32 %v1076, %v1125
    %v1181 = vmul.f32 %v1077, %v1125
    %v1182 = vmul.f32 %v1078, %v1125
    %v1183 = vmul.f32 %v1079, %v1125
    %v1184 = vmul.f32 %v1080, %v1126
    %v1185 = vmul.f32 %v1081, %v1126
    %v1186 = vmul.f32 %v1082, %v1126
    %v1187 = vmul.f32 %v1083, %v1126
    %v1188 = vmul.f32 %v1084, %v1126
    %v1189 = vmul.f32 %v1085, %v1126
    %v1190 = vmul.f32 %v1086, %v1127
    %v1191 = vmul.f32 %v1087, %v1127
    %v1192 = vmul.f32 %v1088, %v1127
    %v1193 = vmul.f32 %v1089, %v1127
    %v1194 = vmul.f32 %v1090, %v1127
    %v1195 = vmul.f32 %v1091, %v1127
    %v1196 = vmul.f32 %v1092, %v1128
    %v1197 = vmul.f32 %v1093, %v1128
    %v1198 = vmul.f32 %v1094, %v1128
    %v1199 = vmul.f32 %v1095, %v1128
    %v1200 = vmul.f32 %v1096, %v1128
    %v1201 = vmul.f32 %v1097, %v1128
    %v1202 = vmul.f32 %v1098, %v1129
    %v1203 = vmul.f32 %v1099, %v1129
    %v1204 = vmul.f32 %v1100, %v1129
    %v1205 = vmul.f32 %v1101, %v1129
    %v1206 = vmul.f32 %v1102, %v1129
    %v1207 = vmul.f32 %v1103, %v1129
    %v1208 = vld [vmem:[%s3] sm:$0xff]
    %v1209 = vld [vmem:[%s3 + $0x8] sm:$0xff]
    %v1210 = vld [vmem:[%s3 + $0x10] sm:$0xff]
    %v1211 = vld [vmem:[%s3 + $0x18] sm:$0xff]
    %v1212 = vld [vmem:[%s3 + $0x20] sm:$0xff]
    %v1213 = vld [vmem:[%s3 + $0x28] sm:$0xff]
    %v1214 = vld [vmem:[%s3 + $0x30] sm:$0xff]
    %v1215 = vld [vmem:[%s3 + $0x38] sm:$0xff]
    %v1216 = vld [vmem:[%s3 + $0x40] sm:$0xff]
    %v1217 = vld [vmem:[%s3 + $0x48] sm:$0xff]
    %v1218 = vld [vmem:[%s3 + $0x50] sm:$0xff]
    %v1219 = vld [vmem:[%s3 + $0x58] sm:$0xff]
    %v1220 = vld [vmem:[%s3 + $0x60] sm:$0xff]
    %v1221 = vld [vmem:[%s3 + $0x68] sm:$0xff]
    %v1222 = vld [vmem:[%s3 + $0x70] sm:$0xff]
    %v1223 = vld [vmem:[%s3 + $0x78] sm:$0xff]
    %v1224 = vld [vmem:[%s3 + $0x80] sm:$0xff]
    %v1225 = vld [vmem:[%s3 + $0x88] sm:$0xff]
    %v1226 = vld [vmem:[%s3 + $0x90] sm:$0xff]
    %v1227 = vld [vmem:[%s3 + $0x98] sm:$0xff]
    %v1228 = vld [vmem:[%s3 + $0xa0] sm:$0xff]
    %v1229 = vld [vmem:[%s3 + $0xa8] sm:$0xff]
    %v1230 = vld [vmem:[%s3 + $0xb0] sm:$0xff]
    %v1231 = vld [vmem:[%s3 + $0xb8] sm:$0xff]
    %v1232 = vld [vmem:[%s3 + $0xc0] sm:$0xff]
    %v1233 = vld [vmem:[%s3 + $0xc8] sm:$0xff]
    %v1234 = vld [vmem:[%s3 + $0xd0] sm:$0xff]
    %v1235 = vld [vmem:[%s3 + $0xd8] sm:$0xff]
    %v1236 = vld [vmem:[%s3 + $0xe0] sm:$0xff]
    %v1237 = vld [vmem:[%s3 + $0xe8] sm:$0xff]
    %v1238 = vld [vmem:[%s3 + $0xf0] sm:$0xff]
    %v1239 = vld [vmem:[%s3 + $0xf8] sm:$0xff]
    %v1240 = vld [vmem:[%s3 + $0x100] sm:$0xff]
    %v1241 = vld [vmem:[%s3 + $0x108] sm:$0xff]
    %v1242 = vld [vmem:[%s3 + $0x110] sm:$0xff]
    %v1243 = vld [vmem:[%s3 + $0x118] sm:$0xff]
    %v1244 = vld [vmem:[%s3 + $0x120] sm:$0xff]
    %v1245 = vld [vmem:[%s3 + $0x128] sm:$0xff]
    %v1246 = vld [vmem:[%s3 + $0x130] sm:$0xff]
    %v1247 = vld [vmem:[%s3 + $0x138] sm:$0xff]
    %v1248 = vld [vmem:[%s3 + $0x140] sm:$0xff]
    %v1249 = vld [vmem:[%s3 + $0x148] sm:$0xff]
    %v1250 = vld [vmem:[%s3 + $0x150] sm:$0xff]
    %v1251 = vld [vmem:[%s3 + $0x158] sm:$0xff]
    %v1252 = vld [vmem:[%s3 + $0x160] sm:$0xff]
    %v1253 = vld [vmem:[%s3 + $0x168] sm:$0xff]
    %v1254 = vld [vmem:[%s3 + $0x170] sm:$0xff]
    %v1255 = vld [vmem:[%s3 + $0x178] sm:$0xff]
    %v1256 = vld [vmem:[%s3 + $0x180] sm:$0xff]
    %v1257 = vld [vmem:[%s3 + $0x188] sm:$0xff]
    %v1258 = vld [vmem:[%s3 + $0x190] sm:$0xff]
    %v1259 = vld [vmem:[%s3 + $0x198] sm:$0xff]
    %v1260 = vld [vmem:[%s3 + $0x1a0] sm:$0xff]
    %v1261 = vld [vmem:[%s3 + $0x1a8] sm:$0xff]
    %v1262 = vld [vmem:[%s3 + $0x1b0] sm:$0xff]
    %v1263 = vld [vmem:[%s3 + $0x1b8] sm:$0xff]
    %v1264 = vld [vmem:[%s3 + $0x1c0] sm:$0xff]
    %v1265 = vld [vmem:[%s3 + $0x1c8] sm:$0xff]
    %v1266 = vld [vmem:[%s3 + $0x1d0] sm:$0xff]
    %v1267 = vld [vmem:[%s3 + $0x1d8] sm:$0xff]
    %v1268 = vld [vmem:[%s3 + $0x1e0] sm:$0xff]
    %v1269 = vld [vmem:[%s3 + $0x1e8] sm:$0xff]
    %v1270 = vld [vmem:[%s3 + $0x1f0] sm:$0xff]
    %v1271 = vld [vmem:[%s3 + $0x1f8] sm:$0xff]
    %v1272 = vld [vmem:[%s3 + $0x200] sm:$0xff]
    %v1273 = vld [vmem:[%s3 + $0x208] sm:$0xff]
    %v1274 = vld [vmem:[%s3 + $0x210] sm:$0xff]
    %v1275 = vld [vmem:[%s3 + $0x218] sm:$0xff]
    %v1276 = vld [vmem:[%s3 + $0x220] sm:$0xff]
    %v1277 = vld [vmem:[%s3 + $0x228] sm:$0xff]
    %v1278 = vld [vmem:[%s3 + $0x230] sm:$0xff]
    %v1279 = vld [vmem:[%s3 + $0x238] sm:$0xff]
    %v1280 = vld [vmem:[%s3 + $0x240] sm:$0xff]
    %v1281 = vld [vmem:[%s3 + $0x248] sm:$0xff]
    %v1282 = vld [vmem:[%s3 + $0x250] sm:$0xff]
    %v1283 = vld [vmem:[%s3 + $0x258] sm:$0xff]
    %v1284 = vld [vmem:[%s3 + $0x260] sm:$0xff]
    %v1285 = vld [vmem:[%s3 + $0x268] sm:$0xff]
    %v1286 = vld [vmem:[%s3 + $0x270] sm:$0xff]
    %v1287 = vld [vmem:[%s3 + $0x278] sm:$0xff]
    %v1288 = vld [vmem:[%s3 + $0x280] sm:$0xff]
    %v1289 = vld [vmem:[%s3 + $0x288] sm:$0xff]
    %v1290 = vld [vmem:[%s3 + $0x290] sm:$0xff]
    %v1291 = vld [vmem:[%s3 + $0x298] sm:$0xff]
    %v1292 = vld [vmem:[%s3 + $0x2a0] sm:$0xff]
    %v1293 = vld [vmem:[%s3 + $0x2a8] sm:$0xff]
    %v1294 = vld [vmem:[%s3 + $0x2b0] sm:$0xff]
    %v1295 = vld [vmem:[%s3 + $0x2b8] sm:$0xff]
    %v1296 = vld [vmem:[%s3 + $0x2c0] sm:$0xff]
    %v1297 = vld [vmem:[%s3 + $0x2c8] sm:$0xff]
    %v1298 = vld [vmem:[%s3 + $0x2d0] sm:$0xff]
    %v1299 = vld [vmem:[%s3 + $0x2d8] sm:$0xff]
    %v1300 = vld [vmem:[%s3 + $0x2e0] sm:$0xff]
    %v1301 = vld [vmem:[%s3 + $0x2e8] sm:$0xff]
    %v1302 = vld [vmem:[%s3 + $0x2f0] sm:$0xff]
    %v1303 = vld [vmem:[%s3 + $0x2f8] sm:$0xff]
    %v1304 = vld [vmem:[%s4] sm:$0x1]
    %v1306 = vlaneseq
    %v1307 = vshrl.u32 %v1306, 7
    %v1308 = vsub.s32 0, %v1307
    %v1309 = vrot.slane %v1304, %v1308
    %1311 = vmatprep.subr.mxu0 0.0
    %1312 = vmatpush1.msra.mxu0 %v1208
    %1313 = vmatprep.subr.mxu0 0.0
    %1314 = vmatpush1.msra.mxu0 %v1209
    %1315 = vmatprep.subr.mxu0 0.0
    %1316 = vmatpush1.msra.mxu0 %v1210
    %1317 = vmatprep.subr.mxu0 0.0
    %1318 = vmatpush1.msra.mxu0 %v1211
    %1319 = vmatprep.subr.mxu0 0.0
    %1320 = vmatpush1.msra.mxu0 %v1212
    %1321 = vmatprep.subr.mxu0 0.0
    %1322 = vmatpush1.msra.mxu0 %v1213
    %1323 = vmatprep.subr.mxu0 0.0
    %1324 = vmatpush1.msra.mxu0 %v1214
    %1325 = vmatprep.subr.mxu0 0.0
    %1326 = vmatpush1.msra.mxu0 %v1215
    %1327 = vmatprep.subr.mxu0 0.0
    %1328 = vmatpush1.msra.mxu0 %v1216
    %1329 = vmatprep.subr.mxu0 0.0
    %1330 = vmatpush1.msra.mxu0 %v1217
    %1331 = vmatprep.subr.mxu0 0.0
    %1332 = vmatpush1.msra.mxu0 %v1218
    %1333 = vmatprep.subr.mxu0 0.0
    %1334 = vmatpush1.msra.mxu0 %v1219
    %1335 = vmatprep.subr.mxu0 0.0
    %1336 = vmatpush1.msra.mxu0 %v1220
    %1337 = vmatprep.subr.mxu0 0.0
    %1338 = vmatpush1.msra.mxu0 %v1221
    %1339 = vmatprep.subr.mxu0 0.0
    %1340 = vmatpush1.msra.mxu0 %v1222
    %1341 = vmatprep.subr.mxu0 0.0
    %1342 = vmatpush1.msra.mxu0 %v1223
    %1343 = vmatprep.subr.mxu0 0.0
    %1344 = vmatpush1.msra.mxu0 %v1224
    %1345 = vmatprep.subr.mxu0 0.0
    %1346 = vmatpush1.msra.mxu0 %v1225
    %1347 = vmatprep.subr.mxu0 0.0
    %1348 = vmatpush1.msra.mxu0 %v1226
    %1349 = vmatprep.subr.mxu0 0.0
    %1350 = vmatpush1.msra.mxu0 %v1227
    %1351 = vmatprep.subr.mxu0 0.0
    %1352 = vmatpush1.msra.mxu0 %v1228
    %1353 = vmatprep.subr.mxu0 0.0
    %1354 = vmatpush1.msra.mxu0 %v1229
    %1355 = vmatprep.subr.mxu0 0.0
    %1356 = vmatpush1.msra.mxu0 %v1230
    %1357 = vmatprep.subr.mxu0 0.0
    %1358 = vmatpush1.msra.mxu0 %v1231
    %1359 = vmatprep.subr.mxu0 0.0
    %1360 = vmatpush1.msra.mxu0 %v1232
    %1361 = vmatprep.subr.mxu0 0.0
    %1362 = vmatpush1.msra.mxu0 %v1233
    %1363 = vmatprep.subr.mxu0 0.0
    %1364 = vmatpush1.msra.mxu0 %v1234
    %1365 = vmatprep.subr.mxu0 0.0
    %1366 = vmatpush1.msra.mxu0 %v1235
    %1367 = vmatprep.subr.mxu0 0.0
    %1368 = vmatpush1.msra.mxu0 %v1236
    %1369 = vmatprep.subr.mxu0 0.0
    %1370 = vmatpush1.msra.mxu0 %v1237
    %1371 = vmatprep.subr.mxu0 0.0
    %1372 = vmatpush1.msra.mxu0 %v1238
    %1373 = vmatprep.subr.mxu0 0.0
    %1374 = vmatpush1.msra.mxu0 %v1239
    %1375 = vmatprep.mubr.f32.mxu0 %v1131
    %1376 = vmatmul.mubr.f32.gmra.mrb[0].mxu0 %v1130
    %v1377 = vpop.f32.mrb[0].mxu0
    %v1378 = vadd.f32 %v1309, %v1377
    %v1379 = vpop.f32.mrb[0].mxu0
    %1380 = vmatprep.mubr.f32.mxu0 %v1137
    %1381 = vmatmul.mubr.f32.gmra.mrb[0].mxu0 %v1136
    %v1382 = vpop.f32.mrb[0].mxu0
    %v1383 = vadd.f32 %v1309, %v1382
    %v1384 = vpop.f32.mrb[0].mxu0
    %1385 = vmatprep.mubr.f32.mxu0 %v1143
    %1386 = vmatmul.mubr.f32.gmra.mrb[0].mxu0 %v1142
    %v1387 = vpop.f32.mrb[0].mxu0
    %v1388 = vadd.f32 %v1309, %v1387
    %v1389 = vpop.f32.mrb[0].mxu0
    %1390 = vmatprep.mubr.f32.mxu0 %v1149
    %1391 = vmatmul.mubr.f32.gmra.mrb[0].mxu0 %v1148
    %v1392 = vpop.f32.mrb[0].mxu0
    %v1393 = vadd.f32 %v1309, %v1392
    %v1394 = vpop.f32.mrb[0].mxu0
    %1395 = vmatprep.mubr.f32.mxu0 %v1155
    %1396 = vmatmul.mubr.f32.gmra.mrb[0].mxu0 %v1154
    %v1397 = vpop.f32.mrb[0].mxu0
    %v1398 = vadd.f32 %v1309, %v1397
    %v1399 = vpop.f32.mrb[0].mxu0
    %1400 = vmatprep.mubr.f32.mxu0 %v1161
    %1401 = vmatmul.mubr.f32.gmra.mrb[0].mxu0 %v1160
    %v1402 = vpop.f32.mrb[0].mxu0
    %v1403 = vadd.f32 %v1309, %v1402
    %v1404 = vpop.f32.mrb[0].mxu0
    %1405 = vmatprep.mubr.f32.mxu0 %v1167
    %1406 = vmatmul.mubr.f32.gmra.mrb[0].mxu0 %v1166
    %v1407 = vpop.f32.mrb[0].mxu0
    %v1408 = vadd.f32 %v1309, %v1407
    %v1409 = vpop.f32.mrb[0].mxu0
    %1410 = vmatprep.mubr.f32.mxu0 %v1173
    %1411 = vmatmul.mubr.f32.gmra.mrb[0].mxu0 %v1172
    %v1412 = vpop.f32.mrb[0].mxu0
    %v1413 = vadd.f32 %v1309, %v1412
    %v1414 = vpop.f32.mrb[0].mxu0
    %1415 = vmatprep.mubr.f32.mxu0 %v1179
    %1416 = vmatmul.mubr.f32.gmra.mrb[0].mxu0 %v1178
    %v1417 = vpop.f32.mrb[0].mxu0
    %v1418 = vadd.f32 %v1309, %v1417
    %v1419 = vpop.f32.mrb[0].mxu0
    %1420 = vmatprep.mubr.f32.mxu0 %v1185
    %1421 = vmatmul.mubr.f32.gmra.mrb[0].mxu0 %v1184
    %v1422 = vpop.f32.mrb[0].mxu0
    %v1423 = vadd.f32 %v1309, %v1422
    %v1424 = vpop.f32.mrb[0].mxu0
    %1425 = vmatprep.mubr.f32.mxu0 %v1191
    %1426 = vmatmul.mubr.f32.gmra.mrb[0].mxu0 %v1190
    %v1427 = vpop.f32.mrb[0].mxu0
    %v1428 = vadd.f32 %v1309, %v1427
    %v1429 = vpop.f32.mrb[0].mxu0
    %1430 = vmatprep.mubr.f32.mxu0 %v1197
    %1431 = vmatmul.mubr.f32.gmra.mrb[0].mxu0 %v1196
    %v1432 = vpop.f32.mrb[0].mxu0
    %v1433 = vadd.f32 %v1309, %v1432
    %v1434 = vpop.f32.mrb[0].mxu0
    %1435 = vmatprep.mubr.f32.mxu0 %v1203
    %1436 = vmatmul.mubr.f32.gmra.mrb[0].mxu0 %v1202
    %v1437 = vpop.f32.mrb[0].mxu0
    %v1438 = vadd.f32 %v1309, %v1437
    %v1439 = vpop.f32.mrb[0].mxu0
    %1440 = vdwg.mxu0
    %1441 = vmatprep.subr.mxu0 0.0
    %1442 = vmatpush1.msra.mxu0 %v1240
    %1443 = vmatprep.subr.mxu0 0.0
    %1444 = vmatpush1.msra.mxu0 %v1241
    %1445 = vmatprep.subr.mxu0 0.0
    %1446 = vmatpush1.msra.mxu0 %v1242
    %1447 = vmatprep.subr.mxu0 0.0
    %1448 = vmatpush1.msra.mxu0 %v1243
    %1449 = vmatprep.subr.mxu0 0.0
    %1450 = vmatpush1.msra.mxu0 %v1244
    %1451 = vmatprep.subr.mxu0 0.0
    %1452 = vmatpush1.msra.mxu0 %v1245
    %1453 = vmatprep.subr.mxu0 0.0
    %1454 = vmatpush1.msra.mxu0 %v1246
    %1455 = vmatprep.subr.mxu0 0.0
    %1456 = vmatpush1.msra.mxu0 %v1247
    %1457 = vmatprep.subr.mxu0 0.0
    %1458 = vmatpush1.msra.mxu0 %v1248
    %1459 = vmatprep.subr.mxu0 0.0
    %1460 = vmatpush1.msra.mxu0 %v1249
    %1461 = vmatprep.subr.mxu0 0.0
    %1462 = vmatpush1.msra.mxu0 %v1250
    %1463 = vmatprep.subr.mxu0 0.0
    %1464 = vmatpush1.msra.mxu0 %v1251
    %1465 = vmatprep.subr.mxu0 0.0
    %1466 = vmatpush1.msra.mxu0 %v1252
    %1467 = vmatprep.subr.mxu0 0.0
    %1468 = vmatpush1.msra.mxu0 %v1253
    %1469 = vmatprep.subr.mxu0 0.0
    %1470 = vmatpush1.msra.mxu0 %v1254
    %1471 = vmatprep.subr.mxu0 0.0
    %1472 = vmatpush1.msra.mxu0 %v1255
    %1473 = vmatprep.subr.mxu0 0.0
    %1474 = vmatpush1.msra.mxu0 %v1256
    %1475 = vmatprep.subr.mxu0 0.0
    %1476 = vmatpush1.msra.mxu0 %v1257
    %1477 = vmatprep.subr.mxu0 0.0
    %1478 = vmatpush1.msra.mxu0 %v1258
    %1479 = vmatprep.subr.mxu0 0.0
    %1480 = vmatpush1.msra.mxu0 %v1259
    %1481 = vmatprep.subr.mxu0 0.0
    %1482 = vmatpush1.msra.mxu0 %v1260
    %1483 = vmatprep.subr.mxu0 0.0
    %1484 = vmatpush1.msra.mxu0 %v1261
    %1485 = vmatprep.subr.mxu0 0.0
    %1486 = vmatpush1.msra.mxu0 %v1262
    %1487 = vmatprep.subr.mxu0 0.0
    %1488 = vmatpush1.msra.mxu0 %v1263
    %1489 = vmatprep.subr.mxu0 0.0
    %1490 = vmatpush1.msra.mxu0 %v1264
    %1491 = vmatprep.subr.mxu0 0.0
    %1492 = vmatpush1.msra.mxu0 %v1265
    %1493 = vmatprep.subr.mxu0 0.0
    %1494 = vmatpush1.msra.mxu0 %v1266
    %1495 = vmatprep.subr.mxu0 0.0
    %1496 = vmatpush1.msra.mxu0 %v1267
    %1497 = vmatprep.subr.mxu0 0.0
    %1498 = vmatpush1.msra.mxu0 %v1268
    %1499 = vmatprep.subr.mxu0 0.0
    %1500 = vmatpush1.msra.mxu0 %v1269
    %1501 = vmatprep.subr.mxu0 0.0
    %1502 = vmatpush1.msra.mxu0 %v1270
    %1503 = vmatprep.subr.mxu0 0.0
    %1504 = vmatpush1.msra.mxu0 %v1271
    %1505 = vmatprep.mubr.f32.mxu0 %v1133
    %1506 = vmatmul.mubr.f32.gmra.mrb[0].mxu0 %v1132
    %v1507 = vpop.f32.mrb[0].mxu0
    %v1508 = vadd.f32 %v1378, %v1507
    %v1509 = vpop.f32.mrb[0].mxu0
    %1510 = vmatprep.mubr.f32.mxu0 %v1139
    %1511 = vmatmul.mubr.f32.gmra.mrb[0].mxu0 %v1138
    %v1512 = vpop.f32.mrb[0].mxu0
    %v1513 = vadd.f32 %v1383, %v1512
    %v1514 = vpop.f32.mrb[0].mxu0
    %1515 = vmatprep.mubr.f32.mxu0 %v1145
    %1516 = vmatmul.mubr.f32.gmra.mrb[0].mxu0 %v1144
    %v1517 = vpop.f32.mrb[0].mxu0
    %v1518 = vadd.f32 %v1388, %v1517
    %v1519 = vpop.f32.mrb[0].mxu0
    %1520 = vmatprep.mubr.f32.mxu0 %v1151
    %1521 = vmatmul.mubr.f32.gmra.mrb[0].mxu0 %v1150
    %v1522 = vpop.f32.mrb[0].mxu0
    %v1523 = vadd.f32 %v1393, %v1522
    %v1524 = vpop.f32.mrb[0].mxu0
    %1525 = vmatprep.mubr.f32.mxu0 %v1157
    %1526 = vmatmul.mubr.f32.gmra.mrb[0].mxu0 %v1156
    %v1527 = vpop.f32.mrb[0].mxu0
    %v1528 = vadd.f32 %v1398, %v1527
    %v1529 = vpop.f32.mrb[0].mxu0
    %1530 = vmatprep.mubr.f32.mxu0 %v1163
    %1531 = vmatmul.mubr.f32.gmra.mrb[0].mxu0 %v1162
    %v1532 = vpop.f32.mrb[0].mxu0
    %v1533 = vadd.f32 %v1403, %v1532
    %v1534 = vpop.f32.mrb[0].mxu0
    %1535 = vmatprep.mubr.f32.mxu0 %v1169
    %1536 = vmatmul.mubr.f32.gmra.mrb[0].mxu0 %v1168
    %v1537 = vpop.f32.mrb[0].mxu0
    %v1538 = vadd.f32 %v1408, %v1537
    %v1539 = vpop.f32.mrb[0].mxu0
    %1540 = vmatprep.mubr.f32.mxu0 %v1175
    %1541 = vmatmul.mubr.f32.gmra.mrb[0].mxu0 %v1174
    %v1542 = vpop.f32.mrb[0].mxu0
    %v1543 = vadd.f32 %v1413, %v1542
    %v1544 = vpop.f32.mrb[0].mxu0
    %1545 = vmatprep.mubr.f32.mxu0 %v1181
    %1546 = vmatmul.mubr.f32.gmra.mrb[0].mxu0 %v1180
    %v1547 = vpop.f32.mrb[0].mxu0
    %v1548 = vadd.f32 %v1418, %v1547
    %v1549 = vpop.f32.mrb[0].mxu0
    %1550 = vmatprep.mubr.f32.mxu0 %v1187
    %1551 = vmatmul.mubr.f32.gmra.mrb[0].mxu0 %v1186
    %v1552 = vpop.f32.mrb[0].mxu0
    %v1553 = vadd.f32 %v1423, %v1552
    %v1554 = vpop.f32.mrb[0].mxu0
    %1555 = vmatprep.mubr.f32.mxu0 %v1193
    %1556 = vmatmul.mubr.f32.gmra.mrb[0].mxu0 %v1192
    %v1557 = vpop.f32.mrb[0].mxu0
    %v1558 = vadd.f32 %v1428, %v1557
    %v1559 = vpop.f32.mrb[0].mxu0
    %1560 = vmatprep.mubr.f32.mxu0 %v1199
    %1561 = vmatmul.mubr.f32.gmra.mrb[0].mxu0 %v1198
    %v1562 = vpop.f32.mrb[0].mxu0
    %v1563 = vadd.f32 %v1433, %v1562
    %v1564 = vpop.f32.mrb[0].mxu0
    %1565 = vmatprep.mubr.f32.mxu0 %v1205
    %1566 = vmatmul.mubr.f32.gmra.mrb[0].mxu0 %v1204
    %v1567 = vpop.f32.mrb[0].mxu0
    %v1568 = vadd.f32 %v1438, %v1567
    %v1569 = vpop.f32.mrb[0].mxu0
    %1570 = vdwg.mxu0
    %1571 = vmatprep.subr.mxu0 0.0
    %1572 = vmatpush1.msra.mxu0 %v1272
    %1573 = vmatprep.subr.mxu0 0.0
    %1574 = vmatpush1.msra.mxu0 %v1273
    %1575 = vmatprep.subr.mxu0 0.0
    %1576 = vmatpush1.msra.mxu0 %v1274
    %1577 = vmatprep.subr.mxu0 0.0
    %1578 = vmatpush1.msra.mxu0 %v1275
    %1579 = vmatprep.subr.mxu0 0.0
    %1580 = vmatpush1.msra.mxu0 %v1276
    %1581 = vmatprep.subr.mxu0 0.0
    %1582 = vmatpush1.msra.mxu0 %v1277
    %1583 = vmatprep.subr.mxu0 0.0
    %1584 = vmatpush1.msra.mxu0 %v1278
    %1585 = vmatprep.subr.mxu0 0.0
    %1586 = vmatpush1.msra.mxu0 %v1279
    %1587 = vmatprep.subr.mxu0 0.0
    %1588 = vmatpush1.msra.mxu0 %v1280
    %1589 = vmatprep.subr.mxu0 0.0
    %1590 = vmatpush1.msra.mxu0 %v1281
    %1591 = vmatprep.subr.mxu0 0.0
    %1592 = vmatpush1.msra.mxu0 %v1282
    %1593 = vmatprep.subr.mxu0 0.0
    %1594 = vmatpush1.msra.mxu0 %v1283
    %1595 = vmatprep.subr.mxu0 0.0
    %1596 = vmatpush1.msra.mxu0 %v1284
    %1597 = vmatprep.subr.mxu0 0.0
    %1598 = vmatpush1.msra.mxu0 %v1285
    %1599 = vmatprep.subr.mxu0 0.0
    %1600 = vmatpush1.msra.mxu0 %v1286
    %1601 = vmatprep.subr.mxu0 0.0
    %1602 = vmatpush1.msra.mxu0 %v1287
    %1603 = vmatprep.subr.mxu0 0.0
    %1604 = vmatpush1.msra.mxu0 %v1288
    %1605 = vmatprep.subr.mxu0 0.0
    %1606 = vmatpush1.msra.mxu0 %v1289
    %1607 = vmatprep.subr.mxu0 0.0
    %1608 = vmatpush1.msra.mxu0 %v1290
    %1609 = vmatprep.subr.mxu0 0.0
    %1610 = vmatpush1.msra.mxu0 %v1291
    %1611 = vmatprep.subr.mxu0 0.0
    %1612 = vmatpush1.msra.mxu0 %v1292
    %1613 = vmatprep.subr.mxu0 0.0
    %1614 = vmatpush1.msra.mxu0 %v1293
    %1615 = vmatprep.subr.mxu0 0.0
    %1616 = vmatpush1.msra.mxu0 %v1294
    %1617 = vmatprep.subr.mxu0 0.0
    %1618 = vmatpush1.msra.mxu0 %v1295
    %1619 = vmatprep.subr.mxu0 0.0
    %1620 = vmatpush1.msra.mxu0 %v1296
    %1621 = vmatprep.subr.mxu0 0.0
    %1622 = vmatpush1.msra.mxu0 %v1297
    %1623 = vmatprep.subr.mxu0 0.0
    %1624 = vmatpush1.msra.mxu0 %v1298
    %1625 = vmatprep.subr.mxu0 0.0
    %1626 = vmatpush1.msra.mxu0 %v1299
    %1627 = vmatprep.subr.mxu0 0.0
    %1628 = vmatpush1.msra.mxu0 %v1300
    %1629 = vmatprep.subr.mxu0 0.0
    %1630 = vmatpush1.msra.mxu0 %v1301
    %1631 = vmatprep.subr.mxu0 0.0
    %1632 = vmatpush1.msra.mxu0 %v1302
    %1633 = vmatprep.subr.mxu0 0.0
    %1634 = vmatpush1.msra.mxu0 %v1303
    %1635 = vmatprep.mubr.f32.mxu0 %v1135
    %1636 = vmatmul.mubr.f32.gmra.mrb[0].mxu0 %v1134
    %v1637 = vpop.f32.mrb[0].mxu0
    %v1638 = vadd.f32 %v1508, %v1637
    %v1639 = vpop.f32.mrb[0].mxu0
    %1640 = vmatprep.mubr.f32.mxu0 %v1141
    %1641 = vmatmul.mubr.f32.gmra.mrb[0].mxu0 %v1140
    %v1642 = vpop.f32.mrb[0].mxu0
    %v1643 = vadd.f32 %v1513, %v1642
    %v1644 = vpop.f32.mrb[0].mxu0
    %1645 = vmatprep.mubr.f32.mxu0 %v1147
    %1646 = vmatmul.mubr.f32.gmra.mrb[0].mxu0 %v1146
    %v1647 = vpop.f32.mrb[0].mxu0
    %v1648 = vadd.f32 %v1518, %v1647
    %v1649 = vpop.f32.mrb[0].mxu0
    %1650 = vmatprep.mubr.f32.mxu0 %v1153
    %1651 = vmatmul.mubr.f32.gmra.mrb[0].mxu0 %v1152
    %v1652 = vpop.f32.mrb[0].mxu0
    %v1653 = vadd.f32 %v1523, %v1652
    %v1654 = vpop.f32.mrb[0].mxu0
    %1655 = vmatprep.mubr.f32.mxu0 %v1159
    %1656 = vmatmul.mubr.f32.gmra.mrb[0].mxu0 %v1158
    %v1657 = vpop.f32.mrb[0].mxu0
    %v1658 = vadd.f32 %v1528, %v1657
    %v1659 = vpop.f32.mrb[0].mxu0
    %1660 = vmatprep.mubr.f32.mxu0 %v1165
    %1661 = vmatmul.mubr.f32.gmra.mrb[0].mxu0 %v1164
    %v1662 = vpop.f32.mrb[0].mxu0
    %v1663 = vadd.f32 %v1533, %v1662
    %v1664 = vpop.f32.mrb[0].mxu0
    %1665 = vmatprep.mubr.f32.mxu0 %v1171
    %1666 = vmatmul.mubr.f32.gmra.mrb[0].mxu0 %v1170
    %v1667 = vpop.f32.mrb[0].mxu0
    %v1668 = vadd.f32 %v1538, %v1667
    %v1669 = vpop.f32.mrb[0].mxu0
    %1670 = vmatprep.mubr.f32.mxu0 %v1177
    %1671 = vmatmul.mubr.f32.gmra.mrb[0].mxu0 %v1176
    %v1672 = vpop.f32.mrb[0].mxu0
    %v1673 = vadd.f32 %v1543, %v1672
    %v1674 = vpop.f32.mrb[0].mxu0
    %1675 = vmatprep.mubr.f32.mxu0 %v1183
    %1676 = vmatmul.mubr.f32.gmra.mrb[0].mxu0 %v1182
    %v1677 = vpop.f32.mrb[0].mxu0
    %v1678 = vadd.f32 %v1548, %v1677
    %v1679 = vpop.f32.mrb[0].mxu0
    %1680 = vmatprep.mubr.f32.mxu0 %v1189
    %1681 = vmatmul.mubr.f32.gmra.mrb[0].mxu0 %v1188
    %v1682 = vpop.f32.mrb[0].mxu0
    %v1683 = vadd.f32 %v1553, %v1682
    %v1684 = vpop.f32.mrb[0].mxu0
    %1685 = vmatprep.mubr.f32.mxu0 %v1195
    %1686 = vmatmul.mubr.f32.gmra.mrb[0].mxu0 %v1194
    %v1687 = vpop.f32.mrb[0].mxu0
    %v1688 = vadd.f32 %v1558, %v1687
    %v1689 = vpop.f32.mrb[0].mxu0
    %1690 = vmatprep.mubr.f32.mxu0 %v1201
    %1691 = vmatmul.mubr.f32.gmra.mrb[0].mxu0 %v1200
    %v1692 = vpop.f32.mrb[0].mxu0
    %v1693 = vadd.f32 %v1563, %v1692
    %v1694 = vpop.f32.mrb[0].mxu0
    %1695 = vmatprep.mubr.f32.mxu0 %v1207
    %1696 = vmatmul.mubr.f32.gmra.mrb[0].mxu0 %v1206
    %v1697 = vpop.f32.mrb[0].mxu0
    %v1698 = vadd.f32 %v1568, %v1697
    %v1699 = vpop.f32.mrb[0].mxu0
    %1700 = vdwg.mxu0
    %1701 = vst [vmem:[%s8] sm:$0xff] %v1638
    %1702 = vst [vmem:[%s8 + $0x8] sm:$0xff] %v1643
    %1703 = vst [vmem:[%s8 + $0x10] sm:$0xff] %v1648
    %1704 = vst [vmem:[%s8 + $0x18] sm:$0xff] %v1653
    %1705 = vst [vmem:[%s8 + $0x20] sm:$0xff] %v1658
    %1706 = vst [vmem:[%s8 + $0x28] sm:$0xff] %v1663
    %1707 = vst [vmem:[%s8 + $0x30] sm:$0xff] %v1668
    %1708 = vst [vmem:[%s8 + $0x38] sm:$0xff] %v1673
    %1709 = vst [vmem:[%s8 + $0x40] sm:$0xff] %v1678
    %1710 = vst [vmem:[%s8 + $0x48] sm:$0xff] %v1683
    %1711 = vst [vmem:[%s8 + $0x50] sm:$0xff] %v1688
    %1712 = vst [vmem:[%s8 + $0x58] sm:$0xff] %v1693
    %1713 = vst [vmem:[%s8 + $0x60] sm:$0x3] %v1698
    %v1714 = vld [vmem:[%s6] sm:$0x3]
    %v1715 = vld [vmem:[%s5] sm:$0x1]
    %v1717 = vlaneseq
    %v1718 = vshrl.u32 %v1717, 7
    %v1719 = vsub.s32 0, %v1718
    %v1720 = vrot.slane %v1715, %v1719
    %vm1722 = vcmask 801792
    %v1724 = vsel %vm1722, %v1714, 0
    %v1727 = vsel %vm784, %v1698, 0
    %1729 = vmatprep.subr.mxu0 0.0
    %1730 = vmatpush1.msra.mxu0 %v1638
    %1731 = vmatprep.subr.mxu0 0.0
    %1732 = vmatpush1.msra.mxu0 %v1643
    %1733 = vmatprep.subr.mxu0 0.0
    %1734 = vmatpush1.msra.mxu0 %v1648
    %1735 = vmatprep.subr.mxu0 0.0
    %1736 = vmatpush1.msra.mxu0 %v1653
    %1737 = vmatprep.subr.mxu0 0.0
    %1738 = vmatpush1.msra.mxu0 %v1658
    %1739 = vmatprep.subr.mxu0 0.0
    %1740 = vmatpush1.msra.mxu0 %v1663
    %1741 = vmatprep.subr.mxu0 0.0
    %1742 = vmatpush1.msra.mxu0 %v1668
    %1743 = vmatprep.subr.mxu0 0.0
    %1744 = vmatpush1.msra.mxu0 %v1673
    %1745 = vmatprep.subr.mxu0 0.0
    %1746 = vmatpush1.msra.mxu0 %v1678
    %1747 = vmatprep.subr.mxu0 0.0
    %1748 = vmatpush1.msra.mxu0 %v1683
    %1749 = vmatprep.subr.mxu0 0.0
    %1750 = vmatpush1.msra.mxu0 %v1688
    %1751 = vmatprep.subr.mxu0 0.0
    %1752 = vmatpush1.msra.mxu0 %v1693
    %1753 = vmatprep.subr.mxu0 0.0
    %1754 = vmatpush1.msra.mxu0 %v1727
    %1755 = vmatprep.subr.mxu0 0.0
    %1756 = vmatpush1.msra.mxu0 0.0
    %1757 = vmatprep.subr.mxu0 0.0
    %1758 = vmatpush1.msra.mxu0 0.0
    %1759 = vmatprep.subr.mxu0 0.0
    %1760 = vmatpush1.msra.mxu0 0.0
    %1761 = vmatprep.subr.mxu0 0.0
    %1762 = vmatpush1.msra.mxu0 0.0
    %1763 = vmatprep.subr.mxu0 0.0
    %1764 = vmatpush1.msra.mxu0 0.0
    %1765 = vmatprep.subr.mxu0 0.0
    %1766 = vmatpush1.msra.mxu0 0.0
    %1767 = vmatprep.subr.mxu0 0.0
    %1768 = vmatpush1.msra.mxu0 0.0
    %1769 = vmatprep.subr.mxu0 0.0
    %1770 = vmatpush1.msra.mxu0 0.0
    %1771 = vmatprep.subr.mxu0 0.0
    %1772 = vmatpush1.msra.mxu0 0.0
    %1773 = vmatprep.subr.mxu0 0.0
    %1774 = vmatpush1.msra.mxu0 0.0
    %1775 = vmatprep.subr.mxu0 0.0
    %1776 = vmatpush1.msra.mxu0 0.0
    %1777 = vmatprep.subr.mxu0 0.0
    %1778 = vmatpush1.msra.mxu0 0.0
    %1779 = vmatprep.subr.mxu0 0.0
    %1780 = vmatpush1.msra.mxu0 0.0
    %1781 = vmatprep.subr.mxu0 0.0
    %1782 = vmatpush1.msra.mxu0 0.0
    %1783 = vmatprep.subr.mxu0 0.0
    %1784 = vmatpush1.msra.mxu0 0.0
    %1785 = vmatprep.subr.mxu0 0.0
    %1786 = vmatpush1.msra.mxu0 0.0
    %1787 = vmatprep.subr.mxu0 0.0
    %1788 = vmatpush1.msra.mxu0 0.0
    %1789 = vmatprep.subr.mxu0 0.0
    %1790 = vmatpush1.msra.mxu0 0.0
    %1791 = vmatprep.subr.mxu0 0.0
    %1792 = vmatpush1.msra.mxu0 0.0
    %1793 = vmatprep.mubr.f32.mxu0 0.0
    %1794 = vmatmul.mubr.f32.gmra.mrb[0].mxu0 %v1724
    %v1795 = vpop.f32.mrb[0].mxu0
    %v1796 = vadd.f32 %v1720, %v1795
    %v1797 = vpop.f32.mrb[0].mxu0
    %1798 = vdwg.mxu0
    %1799 = vst [vmem:[#allocation2] sm:$0x3] %v1796
    // Predicated region
    $region30: #{swin_trans_fer_forward.1} parent=1 // pred_check
      _
    $region31: #{swin_trans_fer_forward.1} parent=1 // pred_check_branch
      %1801 = sbr.rel (0) target = $region33
    $region32: #{swin_trans_fer_forward.1} parent=1 // pred_region
      %s1803 = ssub.s32 32, 32
      %1804 = vsyncadd [#allocation3], %s1803
      %s1806 = sshll.u32 [#allocation2], 4
      %s1807 = int_to_ptr.vmem [resolvable:$true] %s1806
      %1809 = dma.vmem_to_hbm [thread:$0]  %s1807, 32, %s7, [#allocation3]
    $region33: #{swin_trans_fer_forward.1} parent=1 // pred_fallthru
      _
    // Predicated region
    $region34: #{swin_trans_fer_forward.1} parent=1 // pred_check
      _
    $region35: #{swin_trans_fer_forward.1} parent=1 // pred_check_branch
      %1811 = sbr.rel (0) target = $region37
    $region36: #{swin_trans_fer_forward.1} parent=1 // pred_region
      _
    $region37: #{swin_trans_fer_forward.1} parent=1 // pred_fallthru
      _
    // Predicated region
    $region38: #{swin_trans_fer_forward.1} parent=1 // pred_check
      _
    $region39: #{swin_trans_fer_forward.1} parent=1 // pred_check_branch
      %1813 = sbr.rel (0) target = $region41
    $region40: #{swin_trans_fer_forward.1} parent=1 // pred_region
      %1814 = dma.done [#allocation3], 32
    $region41: #{swin_trans_fer_forward.1} parent=1 // pred_fallthru
      _
    // Predicated region
    $region42: #{swin_trans_fer_forward.1} parent=1 // pred_check
      _
    $region43: #{swin_trans_fer_forward.1} parent=1 // pred_check_branch
      %1816 = sbr.rel (0) target = $region45
    $region44: #{swin_trans_fer_forward.1} parent=1 // pred_region
      _
    $region45: #{swin_trans_fer_forward.1} parent=1 // pred_fallthru
      _
    %1817 = vsyncpa [#allocation3], 1

</llo_original>
